<compile_context>
chip_gen: v5e
topology: v5e:2x2
jax: 0.10.0
libtpu: 0.0.40
codegen_flags: <defaults>
</compile_context>

<pallas_src>
import functools

import jax
import jax.numpy as jnp
from jax.experimental import pallas as pl
from jax.experimental.pallas import tpu as pltpu


def _round_up(x, m):
    return ((x + m - 1) // m) * m


def policy_net_kernel(x_ref, w1_ref, b1_ref, w2_ref, b2_ref, w3_ref, b3_ref,
                      o_ref, *, out_dim):
    """One batch tile of the MLP with the batch dimension on the lane axis.

    x_ref : (dp, bb)    zero-padded features (sublanes) x batch tile (lanes)
    w*_ref: transposed, zero-padded weights (out_features_pad, in_features_pad)
    b*_ref: (out_features_pad, 1) biases, broadcast across lanes
    o_ref : (opad, bb)  probabilities in rows [0, out_dim); rows >= out_dim = 0
    """
    hp = jax.lax.Precision.HIGHEST  # full-f32 matmul; default bf16 passes
                                    # caused the previous reference mismatch.
    x = x_ref[...]

    h1 = jnp.maximum(
        jnp.dot(w1_ref[...], x, preferred_element_type=jnp.float32,
                precision=hp) + b1_ref[...], 0.0)
    h2 = jnp.maximum(
        jnp.dot(w2_ref[...], h1, preferred_element_type=jnp.float32,
                precision=hp) + b2_ref[...], 0.0)
    logits = jnp.dot(w3_ref[...], h2, preferred_element_type=jnp.float32,
                     precision=hp) + b3_ref[...]

    opad, bb = o_ref.shape
    row = jax.lax.broadcasted_iota(jnp.int32, (opad, bb), 0)

    if out_dim == 2:
        # Closed-form 2-class softmax (CartPole): p0 = sigmoid(l0 - l1).
        # No cross-sublane reductions; exact division for sampler-safe probs.
        d = logits[0:1, :] - logits[1:2, :]
        p0 = 1.0 / (1.0 + jnp.exp(-d))
        p0 = jnp.broadcast_to(p0, (opad, bb))
        o_ref[...] = jnp.where(row == 0, p0,
                               jnp.where(row == 1, 1.0 - p0, 0.0)
                               ).astype(o_ref.dtype)
    else:
        # Generic softmax over the action (sublane) axis; padded action rows
        # are masked so they contribute exp() = 0 to the denominator.
        lg = jnp.where(row < out_dim, logits, -1e30)
        m = jnp.max(lg, axis=0, keepdims=True)
        e = jnp.where(row < out_dim, jnp.exp(lg - m), 0.0)
        denom = jnp.sum(e, axis=0, keepdims=True)
        o_ref[...] = (e / denom).astype(o_ref.dtype)


def pack_params(params):
    """Transpose + zero-pad weights/biases for the batch-on-lanes layout."""
    w1, b1, w2, b2, w3, b3 = params
    input_dim, hidden_dim = w1.shape
    output_dim = w3.shape[1]
    dp = _round_up(input_dim, 8)
    hpad = _round_up(hidden_dim, 8)
    opad = _round_up(max(output_dim, 8), 8)

    w1t = jnp.zeros((hpad, dp), jnp.float32).at[:hidden_dim, :input_dim].set(w1.T)
    w2t = jnp.zeros((hpad, hpad), jnp.float32).at[:hidden_dim, :hidden_dim].set(w2.T)
    w3t = jnp.zeros((opad, hpad), jnp.float32).at[:output_dim, :hidden_dim].set(w3.T)
    b1p = jnp.zeros((hpad, 1), jnp.float32).at[:hidden_dim, 0].set(b1.reshape(-1))
    b2p = jnp.zeros((hpad, 1), jnp.float32).at[:hidden_dim, 0].set(b2.reshape(-1))
    b3p = jnp.zeros((opad, 1), jnp.float32).at[:output_dim, 0].set(b3.reshape(-1))

    meta = dict(input_dim=input_dim, hidden_dim=hidden_dim,
                output_dim=output_dim, dp=dp, hpad=hpad, opad=opad)
    return (w1t, b1p, w2t, b2p, w3t, b3p), meta


def _choose_block(B, block_b):
    """Lane-dense batch tile: multiple of 128, >=2 blocks for large batches."""
    bb = min(_round_up(block_b, 128), _round_up(B, 128))
    if B >= 256:
        # Keep at least 2 grid blocks so ("parallel",) uses both TCs on v7x.
        bb = min(bb, _round_up(pl.cdiv(B, 2), 128))
    return max(bb, 128)


def policy_net_forward(x, packed, meta, block_b=1024):
    B, D = x.shape
    assert D == meta["input_dim"]
    dp, opad, out_dim = meta["dp"], meta["opad"], meta["output_dim"]

    bb = _choose_block(B, block_b)
    b_pad = _round_up(B, bb)
    n_blocks = b_pad // bb

    # Features on sublanes, batch on lanes.  Padded batch columns (>= B)
    # compute finite bias-only garbage and are sliced off below — do not feed
    # them anywhere else.
    xt = jnp.zeros((dp, b_pad), jnp.float32).at[:D, :B].set(x.T)

    kernel = functools.partial(policy_net_kernel, out_dim=out_dim)
    const = lambda i: (0, 0)   # params DMA'd once, VMEM-resident across steps
    out = pl.pallas_call(
        kernel,
        out_shape=jax.ShapeDtypeStruct((opad, b_pad), jnp.float32),
        grid=(n_blocks,),
        in_specs=[
            pl.BlockSpec((dp, bb), lambda i: (0, i)),
            pl.BlockSpec(packed[0].shape, const),   # w1^T
            pl.BlockSpec(packed[1].shape, const),   # b1
            pl.BlockSpec(packed[2].shape, const),   # w2^T
            pl.BlockSpec(packed[3].shape, const),   # b2
            pl.BlockSpec(packed[4].shape, const),   # w3^T
            pl.BlockSpec(packed[5].shape, const),   # b3
        ],
        out_specs=pl.BlockSpec((opad, bb), lambda i: (0, i)),
        compiler_params=pltpu.CompilerParams(
            dimension_semantics=("parallel",)),
    )(xt, *packed)
    return out[:out_dim, :B].T


def init_params(key, input_dim, hidden_dim, output_dim):
    """Deterministic init mimicking torch.nn.Linear's U(-1/sqrt(in), 1/sqrt(in))."""
    ks = jax.random.split(key, 6)

    def linear(kw, kb, fan_in, fan_out):
        bound = 1.0 / jnp.sqrt(jnp.float32(fan_in))
        w = jax.random.uniform(kw, (fan_in, fan_out), jnp.float32, -bound, bound)
        b = jax.random.uniform(kb, (1, fan_out), jnp.float32, -bound, bound)
        return w, b

    w1, b1 = linear(ks[0], ks[1], input_dim, hidden_dim)
    w2, b2 = linear(ks[2], ks[3], hidden_dim, hidden_dim)
    w3, b3 = linear(ks[4], ks[5], hidden_dim, output_dim)
    return (w1, b1, w2, b2, w3, b3)


def reference_forward(x, params):
    w1, b1, w2, b2, w3, b3 = params
    hp = jax.lax.Precision.HIGHEST
    h1 = jnp.maximum(jnp.dot(x, w1, precision=hp) + b1, 0.0)
    h2 = jnp.maximum(jnp.dot(h1, w2, precision=hp) + b2, 0.0)
    return jax.nn.softmax(jnp.dot(h2, w3, precision=hp) + b3, axis=1)


def _check(x, params, packed, meta, block_b):
    probs = jax.block_until_ready(
        policy_net_forward(x, packed, meta, block_b=block_b))
    ref = reference_forward(x, params)
    assert probs.shape == ref.shape, (probs.shape, ref.shape)
    err = float(jnp.max(jnp.abs(probs - ref)))
    assert jnp.allclose(probs, ref, atol=2e-3, rtol=1e-3), f"mismatch, max|err|={err}"
    assert jnp.allclose(jnp.sum(probs, axis=1), 1.0, atol=1e-3), "rows don't sum to 1"


if __name__ == "__main__":
    key = jax.random.PRNGKey(0)
    k_x1, k_x2, k_x3, k_p, k_p3 = jax.random.split(key, 5)

    # CartPole dims: state_dim=4, hidden=32, action_dim=2.
    input_dim, hidden_dim, output_dim = 4, 32, 2
    params = init_params(k_p, input_dim, hidden_dim, output_dim)
    packed, meta = pack_params(params)

    # Rollout-sized call: 2 grid blocks of 256 lanes (exercises megacore path).
    x_big = jax.random.normal(k_x1, (512, input_dim), dtype=jnp.float32)
    _check(x_big, params, packed, meta, block_b=1024)

    # Small-batch call (single 128-lane block, batch tail padded).
    x_small = jax.random.normal(k_x2, (8, input_dim), dtype=jnp.float32)
    _check(x_small, params, packed, meta, block_b=1024)

    # Generic-softmax path (output_dim != 2).
    params3 = init_params(k_p3, input_dim, hidden_dim, 3)
    packed3, meta3 = pack_params(params3)
    x3 = jax.random.normal(k_x3, (16, input_dim), dtype=jnp.float32)
    _check(x3, params3, packed3, meta3, block_b=1024)

    print("KERNEL_OK")
</pallas_src>

<mosaic_0001>
module attributes {stable_mosaic.version = 11 : i64} {
  func.func @policy_net_kernel(%arg0: i32, %arg1: memref<8x256xf32, #tpu.memory_space<vmem>>, %arg2: memref<32x8xf32, #tpu.memory_space<vmem>>, %arg3: memref<32x1xf32, #tpu.memory_space<vmem>>, %arg4: memref<32x32xf32, #tpu.memory_space<vmem>>, %arg5: memref<32x1xf32, #tpu.memory_space<vmem>>, %arg6: memref<8x32xf32, #tpu.memory_space<vmem>>, %arg7: memref<8x1xf32, #tpu.memory_space<vmem>>, %arg8: memref<8x256xf32, #tpu.memory_space<vmem>>) attributes {dimension_semantics = [#tpu.dimension_semantics<parallel>], iteration_bounds = array<i64: 2>, scalar_prefetch = 0 : i64, scratch_operands = 0 : i64, tpu.core_type = #tpu.core_type<tc>, window_params = [{transform_indices = @transform_0, window_bounds = array<i64: 8, 256>}, {pipeline_mode = #tpu.pipeline_mode<synchronous>, transform_indices = @transform_1, window_bounds = array<i64: 32, 8>}, {pipeline_mode = #tpu.pipeline_mode<synchronous>, transform_indices = @transform_2, window_bounds = array<i64: 32, 1>}, {pipeline_mode = #tpu.pipeline_mode<synchronous>, transform_indices = @transform_3, window_bounds = array<i64: 32, 32>}, {pipeline_mode = #tpu.pipeline_mode<synchronous>, transform_indices = @transform_4, window_bounds = array<i64: 32, 1>}, {pipeline_mode = #tpu.pipeline_mode<synchronous>, transform_indices = @transform_5, window_bounds = array<i64: 8, 32>}, {pipeline_mode = #tpu.pipeline_mode<synchronous>, transform_indices = @transform_6, window_bounds = array<i64: 8, 1>}, {transform_indices = @transform_7, window_bounds = array<i64: 8, 256>}]} {
    %c0 = arith.constant 0 : index
    %c0_0 = arith.constant 0 : index
    %0 = vector.load %arg1[%c0, %c0_0] : memref<8x256xf32, #tpu.memory_space<vmem>>, vector<8x256xf32>
    %c0_1 = arith.constant 0 : index
    %c0_2 = arith.constant 0 : index
    %1 = vector.load %arg2[%c0_1, %c0_2] : memref<32x8xf32, #tpu.memory_space<vmem>>, vector<32x8xf32>
    %cst = arith.constant dense<0.000000e+00> : vector<32x256xf32>
    %2 = tpu.matmul %1, %0, %cst {dimension_numbers = #tpu.dot_dimension_numbers<[1], [0], [0], [1], [0, 0, 1, 1], [], []>, precision = #tpu.contract_precision<fp32>} : vector<32x8xf32>, vector<8x256xf32>, vector<32x256xf32> -> vector<32x256xf32>
    %c0_3 = arith.constant 0 : index
    %c0_4 = arith.constant 0 : index
    %3 = vector.load %arg3[%c0_3, %c0_4] : memref<32x1xf32, #tpu.memory_space<vmem>>, vector<32x1xf32>
    %4 = vector.broadcast %3 : vector<32x1xf32> to vector<32x256xf32>
    %5 = arith.addf %2, %4 : vector<32x256xf32>
    %cst_5 = arith.constant 0.000000e+00 : f32
    %6 = vector.broadcast %cst_5 : f32 to vector<32x256xf32>
    %7 = arith.maximumf %5, %6 : vector<32x256xf32>
    %c0_6 = arith.constant 0 : index
    %c0_7 = arith.constant 0 : index
    %8 = vector.load %arg4[%c0_6, %c0_7] : memref<32x32xf32, #tpu.memory_space<vmem>>, vector<32x32xf32>
    %cst_8 = arith.constant dense<0.000000e+00> : vector<32x256xf32>
    %9 = tpu.matmul %8, %7, %cst_8 {dimension_numbers = #tpu.dot_dimension_numbers<[1], [0], [0], [1], [0, 0, 1, 1], [], []>, precision = #tpu.contract_precision<fp32>} : vector<32x32xf32>, vector<32x256xf32>, vector<32x256xf32> -> vector<32x256xf32>
    %c0_9 = arith.constant 0 : index
    %c0_10 = arith.constant 0 : index
    %10 = vector.load %arg5[%c0_9, %c0_10] : memref<32x1xf32, #tpu.memory_space<vmem>>, vector<32x1xf32>
    %11 = vector.broadcast %10 : vector<32x1xf32> to vector<32x256xf32>
    %12 = arith.addf %9, %11 : vector<32x256xf32>
    %cst_11 = arith.constant 0.000000e+00 : f32
    %13 = vector.broadcast %cst_11 : f32 to vector<32x256xf32>
    %14 = arith.maximumf %12, %13 : vector<32x256xf32>
    %c0_12 = arith.constant 0 : index
    %c0_13 = arith.constant 0 : index
    %15 = vector.load %arg6[%c0_12, %c0_13] : memref<8x32xf32, #tpu.memory_space<vmem>>, vector<8x32xf32>
    %cst_14 = arith.constant dense<0.000000e+00> : vector<8x256xf32>
    %16 = tpu.matmul %15, %14, %cst_14 {dimension_numbers = #tpu.dot_dimension_numbers<[1], [0], [0], [1], [0, 0, 1, 1], [], []>, precision = #tpu.contract_precision<fp32>} : vector<8x32xf32>, vector<32x256xf32>, vector<8x256xf32> -> vector<8x256xf32>
    %c0_15 = arith.constant 0 : index
    %c0_16 = arith.constant 0 : index
    %17 = vector.load %arg7[%c0_15, %c0_16] : memref<8x1xf32, #tpu.memory_space<vmem>>, vector<8x1xf32>
    %18 = vector.broadcast %17 : vector<8x1xf32> to vector<8x256xf32>
    %19 = arith.addf %16, %18 : vector<8x256xf32>
    %20 = tpu.iota {dimensions = array<i32: 0>} : vector<8x256xi32>
    %21 = vector.extract_strided_slice %19 {offsets = [0, 0], sizes = [1, 256], strides = [1, 1]} : vector<8x256xf32> to vector<1x256xf32>
    %22 = vector.extract_strided_slice %19 {offsets = [1, 0], sizes = [1, 256], strides = [1, 1]} : vector<8x256xf32> to vector<1x256xf32>
    %23 = arith.subf %21, %22 : vector<1x256xf32>
    %cst_17 = arith.constant 0.000000e+00 : f32
    %24 = vector.broadcast %cst_17 : f32 to vector<1x256xf32>
    %25 = arith.subf %24, %23 : vector<1x256xf32>
    %26 = math.exp %25 : vector<1x256xf32>
    %cst_18 = arith.constant 1.000000e+00 : f32
    %27 = vector.broadcast %cst_18 : f32 to vector<1x256xf32>
    %28 = arith.addf %27, %26 : vector<1x256xf32>
    %cst_19 = arith.constant 1.000000e+00 : f32
    %29 = vector.broadcast %cst_19 : f32 to vector<1x256xf32>
    %30 = arith.divf %29, %28 : vector<1x256xf32>
    %31 = vector.shape_cast %30 : vector<1x256xf32> to vector<1x256xf32>
    %32 = vector.broadcast %31 : vector<1x256xf32> to vector<8x256xf32>
    %c0_i32 = arith.constant 0 : i32
    %33 = vector.broadcast %c0_i32 : i32 to vector<8x256xi32>
    %34 = arith.cmpi eq, %20, %33 : vector<8x256xi32>
    %c1_i32 = arith.constant 1 : i32
    %35 = vector.broadcast %c1_i32 : i32 to vector<8x256xi32>
    %36 = arith.cmpi eq, %20, %35 : vector<8x256xi32>
    %cst_20 = arith.constant 1.000000e+00 : f32
    %37 = vector.broadcast %cst_20 : f32 to vector<8x256xf32>
    %38 = arith.subf %37, %32 : vector<8x256xf32>
    %cst_21 = arith.constant 0.000000e+00 : f32
    %39 = vector.broadcast %cst_21 : f32 to vector<8x256xf32>
    %40 = arith.select %36, %38, %39 : vector<8x256xi1>, vector<8x256xf32>
    %41 = arith.select %34, %32, %40 : vector<8x256xi1>, vector<8x256xf32>
    %c0_22 = arith.constant 0 : index
    %c0_23 = arith.constant 0 : index
    %42 = vector.load %arg8[%c0_22, %c0_23] : memref<8x256xf32, #tpu.memory_space<vmem>>, vector<8x256xf32>
    tpu.vector_store %arg8[%c0_22, %c0_23], %41 {strides = array<i32>} : memref<8x256xf32, #tpu.memory_space<vmem>>, vector<8x256xf32>,
    return
  }
  func.func @transform_0(%arg0: i32) -> (i32, i32) {
    %c0_i32 = arith.constant 0 : i32
    %c0_i32_0 = arith.constant 0 : i32
    return %c0_i32, %arg0 : i32, i32
  }
  func.func @transform_1(%arg0: i32) -> (i32, i32) {
    %c0_i32 = arith.constant 0 : i32
    %c0_i32_0 = arith.constant 0 : i32
    %c0_i32_1 = arith.constant 0 : i32
    return %c0_i32, %c0_i32_0 : i32, i32
  }
  func.func @transform_2(%arg0: i32) -> (i32, i32) {
    %c0_i32 = arith.constant 0 : i32
    %c0_i32_0 = arith.constant 0 : i32
    %c0_i32_1 = arith.constant 0 : i32
    return %c0_i32, %c0_i32_0 : i32, i32
  }
  func.func @transform_3(%arg0: i32) -> (i32, i32) {
    %c0_i32 = arith.constant 0 : i32
    %c0_i32_0 = arith.constant 0 : i32
    %c0_i32_1 = arith.constant 0 : i32
    return %c0_i32, %c0_i32_0 : i32, i32
  }
  func.func @transform_4(%arg0: i32) -> (i32, i32) {
    %c0_i32 = arith.constant 0 : i32
    %c0_i32_0 = arith.constant 0 : i32
    %c0_i32_1 = arith.constant 0 : i32
    return %c0_i32, %c0_i32_0 : i32, i32
  }
  func.func @transform_5(%arg0: i32) -> (i32, i32) {
    %c0_i32 = arith.constant 0 : i32
    %c0_i32_0 = arith.constant 0 : i32
    %c0_i32_1 = arith.constant 0 : i32
    return %c0_i32, %c0_i32_0 : i32, i32
  }
  func.func @transform_6(%arg0: i32) -> (i32, i32) {
    %c0_i32 = arith.constant 0 : i32
    %c0_i32_0 = arith.constant 0 : i32
    %c0_i32_1 = arith.constant 0 : i32
    return %c0_i32, %c0_i32_0 : i32, i32
  }
  func.func @transform_7(%arg0: i32) -> (i32, i32) {
    %c0_i32 = arith.constant 0 : i32
    %c0_i32_0 = arith.constant 0 : i32
    return %c0_i32, %arg0 : i32, i32
  }
}

</mosaic_0001>

<llo_original>
// kernel: tpu_custom_call.1
$region0: #{tpu_custom_call.1}
  #allocation0 [shape = 'u32[]', space=smem, size = 0x4, offset = 0x4, fixed_abs, tag = 'smem constant byte address 0x4 - core index']
  #allocation1 [shape = 'u32[72,128]{1,0:T(1,128)}', space=vmem, size = 0x9000, scoped, tag = 'internal scratch']
  %s0 = inlined_call_operand.vmem [shape: f32[8,512], index: 0, kind: input, shape index: {}]
  %s1 = inlined_call_operand.vmem [shape: f32[32,8], index: 1, kind: input, shape index: {}]
  %s2 = inlined_call_operand.vmem [shape: f32[32,1], index: 2, kind: input, shape index: {}]
  %s3 = inlined_call_operand.vmem [shape: f32[32,32], index: 3, kind: input, shape index: {}]
  %s4 = inlined_call_operand.vmem [shape: f32[32,1], index: 4, kind: input, shape index: {}]
  %s5 = inlined_call_operand.vmem [shape: f32[8,32], index: 5, kind: input, shape index: {}]
  %s6 = inlined_call_operand.vmem [shape: f32[8,1], index: 6, kind: input, shape index: {}]
  %s7 = inlined_call_operand.hbm [shape: f32[8,512], index: 7, kind: output, shape index: {}]
  %s8 = sld [smem:[#allocation0]]
  $region61: #{tpu_custom_call.1} parent=0
    _
  %s10 = ssub.s32 1, %s8
  %s11 = scalar_select 0, %s10, %s8
  $region1: #{tpu_custom_call.1} parent=0
    #allocation2 [shape = 'u8[16384]{0}', space=vmem, size = 0x4000, scoped, tag = 'output window, operand 0']
    #allocation3 [shape = 's32[2]{0}', space=sflag, size = 0x8, scoped, tag = 'scoped memory for tpu_custom_call.1']
    %12 = vsyncpa [#allocation3], 0
    %s13 = scalar_lea.sflag [#allocation3], 1
    %14 = vsyncpa %s13, 0
    loop: start=0, step=1, limit=4
    $region2: #{tpu_custom_call.1} parent=1 // loop_pre_header
      _
    $region3: #{tpu_custom_call.1} parent=1 // loop_header
      %s16 = sphi 0, %s20
      %p17 = scmp.ge.s32.totalorder %s16, 4
      %s26 = sphi 0, %s28
      %s29 = sphi 0, %s26
      %s30 = sphi 0, %s29
      %s46 = sphi 0, %s30
      %s50 = sphi 0, %s50
      %s52 = sphi 0, %s50
      %s53 = sphi 0, %s52
      %s67 = sphi 0, %s53
      %s71 = sphi 0, %s71
      %s73 = sphi 0, %s71
      %s74 = sphi 0, %s73
      %s88 = sphi 0, %s74
      %s92 = sphi 0, %s92
      %s94 = sphi 0, %s92
      %s95 = sphi 0, %s94
      %s109 = sphi 0, %s95
      %s113 = sphi 0, %s113
      %s115 = sphi 0, %s113
      %s116 = sphi 0, %s115
      %s130 = sphi 0, %s116
      %s134 = sphi 0, %s134
      %s136 = sphi 0, %s134
      %s137 = sphi 0, %s136
      %s151 = sphi 0, %s137
      %s155 = sphi 0, %s155
      %s157 = sphi 0, %s155
      %s158 = sphi 0, %s157
      %s172 = sphi 0, %s158
      %s178 = sphi 0, %s180
      %s181 = sphi 0, %s178
      %s182 = sphi 0, %s181
      %s198 = sphi 0, %s182
    $region4: #{tpu_custom_call.1} parent=1 // loop_header_branch
      %19 = sbr.rel (%p17) target = $region8
    $region5: #{tpu_custom_call.1} parent=1 // loop_body
      %s21 = ssub.s32 %s16, 1
      %s22 = ssub.s32 %s16, 2
      %s23 = sadd.s32 %s16, 1
      %s24 = ssub.s32 %s16, %s23
      %p25 = scmp.eq.s32.totalorder %s24, 0
      %s27 = sadd.s32 %s26, 1
      %s28 = scalar_select %p25, %s26, %s27
      %p31 = pneg %p25
      %p32 = scmp.eq.s32.totalorder %s16, 1
      %p33 = por %p31, %p32
      %p34 = scmp.ne.s32.totalorder %s26, %s29
      %p35 = scmp.eq.s32.totalorder %s16, 0
      %p36 = por %p34, %p35
      %p37 = scmp.ne.s32.totalorder %s26, %s29
      %p38 = scmp.eq.s32.totalorder %s21, 1
      %p39 = por %p37, %p38
      %p40 = scmp.ne.s32.totalorder %s29, %s30
      %p41 = scmp.eq.s32.totalorder %s21, 0
      %p42 = por %p40, %p41
      %p43 = scmp.ne.s32.totalorder %s29, %s30
      %p44 = scmp.eq.s32.totalorder %s22, 1
      %p45 = por %p43, %p44
      %p47 = scmp.ne.s32.totalorder %s30, %s46
      %p48 = scmp.eq.s32.totalorder %s22, 0
      %p49 = por %p47, %p48
      %s51 = sadd.s32 %s50, 1
      %p54 = scmp.eq.s32.totalorder %s16, 1
      %p55 = scmp.ne.s32.totalorder %s50, %s52
      %p56 = scmp.eq.s32.totalorder %s16, 0
      %p57 = por %p55, %p56
      %p58 = scmp.ne.s32.totalorder %s50, %s52
      %p59 = scmp.eq.s32.totalorder %s21, 1
      %p60 = por %p58, %p59
      %p61 = scmp.ne.s32.totalorder %s52, %s53
      %p62 = scmp.eq.s32.totalorder %s21, 0
      %p63 = por %p61, %p62
      %p64 = scmp.ne.s32.totalorder %s52, %s53
      %p65 = scmp.eq.s32.totalorder %s22, 1
      %p66 = por %p64, %p65
      %p68 = scmp.ne.s32.totalorder %s53, %s67
      %p69 = scmp.eq.s32.totalorder %s22, 0
      %p70 = por %p68, %p69
      %s72 = sadd.s32 %s71, 1
      %p75 = scmp.eq.s32.totalorder %s16, 1
      %p76 = scmp.ne.s32.totalorder %s71, %s73
      %p77 = scmp.eq.s32.totalorder %s16, 0
      %p78 = por %p76, %p77
      %p79 = scmp.ne.s32.totalorder %s71, %s73
      %p80 = scmp.eq.s32.totalorder %s21, 1
      %p81 = por %p79, %p80
      %p82 = scmp.ne.s32.totalorder %s73, %s74
      %p83 = scmp.eq.s32.totalorder %s21, 0
      %p84 = por %p82, %p83
      %p85 = scmp.ne.s32.totalorder %s73, %s74
      %p86 = scmp.eq.s32.totalorder %s22, 1
      %p87 = por %p85, %p86
      %p89 = scmp.ne.s32.totalorder %s74, %s88
      %p90 = scmp.eq.s32.totalorder %s22, 0
      %p91 = por %p89, %p90
      %s93 = sadd.s32 %s92, 1
      %p96 = scmp.eq.s32.totalorder %s16, 1
      %p97 = scmp.ne.s32.totalorder %s92, %s94
      %p98 = scmp.eq.s32.totalorder %s16, 0
      %p99 = por %p97, %p98
      %p100 = scmp.ne.s32.totalorder %s92, %s94
      %p101 = scmp.eq.s32.totalorder %s21, 1
      %p102 = por %p100, %p101
      %p103 = scmp.ne.s32.totalorder %s94, %s95
      %p104 = scmp.eq.s32.totalorder %s21, 0
      %p105 = por %p103, %p104
      %p106 = scmp.ne.s32.totalorder %s94, %s95
      %p107 = scmp.eq.s32.totalorder %s22, 1
      %p108 = por %p106, %p107
      %p110 = scmp.ne.s32.totalorder %s95, %s109
      %p111 = scmp.eq.s32.totalorder %s22, 0
      %p112 = por %p110, %p111
      %s114 = sadd.s32 %s113, 1
      %p117 = scmp.eq.s32.totalorder %s16, 1
      %p118 = scmp.ne.s32.totalorder %s113, %s115
      %p119 = scmp.eq.s32.totalorder %s16, 0
      %p120 = por %p118, %p119
      %p121 = scmp.ne.s32.totalorder %s113, %s115
      %p122 = scmp.eq.s32.totalorder %s21, 1
      %p123 = por %p121, %p122
      %p124 = scmp.ne.s32.totalorder %s115, %s116
      %p125 = scmp.eq.s32.totalorder %s21, 0
      %p126 = por %p124, %p125
      %p127 = scmp.ne.s32.totalorder %s115, %s116
      %p128 = scmp.eq.s32.totalorder %s22, 1
      %p129 = por %p127, %p128
      %p131 = scmp.ne.s32.totalorder %s116, %s130
      %p132 = scmp.eq.s32.totalorder %s22, 0
      %p133 = por %p131, %p132
      %s135 = sadd.s32 %s134, 1
      %p138 = scmp.eq.s32.totalorder %s16, 1
      %p139 = scmp.ne.s32.totalorder %s134, %s136
      %p140 = scmp.eq.s32.totalorder %s16, 0
      %p141 = por %p139, %p140
      %p142 = scmp.ne.s32.totalorder %s134, %s136
      %p143 = scmp.eq.s32.totalorder %s21, 1
      %p144 = por %p142, %p143
      %p145 = scmp.ne.s32.totalorder %s136, %s137
      %p146 = scmp.eq.s32.totalorder %s21, 0
      %p147 = por %p145, %p146
      %p148 = scmp.ne.s32.totalorder %s136, %s137
      %p149 = scmp.eq.s32.totalorder %s22, 1
      %p150 = por %p148, %p149
      %p152 = scmp.ne.s32.totalorder %s137, %s151
      %p153 = scmp.eq.s32.totalorder %s22, 0
      %p154 = por %p152, %p153
      %s156 = sadd.s32 %s155, 1
      %p159 = scmp.eq.s32.totalorder %s16, 1
      %p160 = scmp.ne.s32.totalorder %s155, %s157
      %p161 = scmp.eq.s32.totalorder %s16, 0
      %p162 = por %p160, %p161
      %p163 = scmp.ne.s32.totalorder %s155, %s157
      %p164 = scmp.eq.s32.totalorder %s21, 1
      %p165 = por %p163, %p164
      %p166 = scmp.ne.s32.totalorder %s157, %s158
      %p167 = scmp.eq.s32.totalorder %s21, 0
      %p168 = por %p166, %p167
      %p169 = scmp.ne.s32.totalorder %s157, %s158
      %p170 = scmp.eq.s32.totalorder %s22, 1
      %p171 = por %p169, %p170
      %p173 = scmp.ne.s32.totalorder %s158, %s172
      %p174 = scmp.eq.s32.totalorder %s22, 0
      %p175 = por %p173, %p174
      %s176 = ssub.s32 %s16, %s23
      %p177 = scmp.eq.s32.totalorder %s176, 0
      %s179 = sadd.s32 %s178, 1
      %s180 = scalar_select %p177, %s178, %s179
      %p183 = pneg %p177
      %p184 = scmp.eq.s32.totalorder %s16, 1
      %p185 = por %p183, %p184
      %p186 = scmp.ne.s32.totalorder %s178, %s181
      %p187 = scmp.eq.s32.totalorder %s16, 0
      %p188 = por %p186, %p187
      %p189 = scmp.ne.s32.totalorder %s178, %s181
      %p190 = scmp.eq.s32.totalorder %s21, 1
      %p191 = por %p189, %p190
      %p192 = scmp.ne.s32.totalorder %s181, %s182
      %p193 = scmp.eq.s32.totalorder %s21, 0
      %p194 = por %p192, %p193
      %p195 = scmp.ne.s32.totalorder %s181, %s182
      %p196 = scmp.eq.s32.totalorder %s22, 1
      %p197 = por %p195, %p196
      %p199 = scmp.ne.s32.totalorder %s182, %s198
      %p200 = scmp.eq.s32.totalorder %s22, 0
      %p201 = por %p199, %p200
      %p202 = scmp.le.s32.totalorder 1, %s16
      %p203 = scmp.lt.s32.totalorder %s16, 3
      %p204 = pnand %p202, %p203
      %p205 = pneg %p204
      // Predicated region
      $region9: #{tpu_custom_call.1} parent=5 // pred_check
        _
      $region10: #{tpu_custom_call.1} parent=5 // pred_check_branch
        %207 = sbr.rel (%p204) target = $region12
      $region11: #{tpu_custom_call.1} parent=5 // pred_region
        %s208 = ssub.s32 %s16, 1
        // Predicated region
        $region13: #{tpu_custom_call.1} parent=11 // pred_check
          %p209 = pneg %p63
        $region14: #{tpu_custom_call.1} parent=11 // pred_check_branch
          %211 = sbr.rel (%p209) target = $region16
        $region15: #{tpu_custom_call.1} parent=11 // pred_region
          _
        $region16: #{tpu_custom_call.1} parent=11 // pred_fallthru
          _
        // Predicated region
        $region17: #{tpu_custom_call.1} parent=11 // pred_check
          %p212 = pneg %p84
        $region18: #{tpu_custom_call.1} parent=11 // pred_check_branch
          %214 = sbr.rel (%p212) target = $region20
        $region19: #{tpu_custom_call.1} parent=11 // pred_region
          _
        $region20: #{tpu_custom_call.1} parent=11 // pred_fallthru
          _
        // Predicated region
        $region21: #{tpu_custom_call.1} parent=11 // pred_check
          %p215 = pneg %p105
        $region22: #{tpu_custom_call.1} parent=11 // pred_check_branch
          %217 = sbr.rel (%p215) target = $region24
        $region23: #{tpu_custom_call.1} parent=11 // pred_region
          _
        $region24: #{tpu_custom_call.1} parent=11 // pred_fallthru
          _
        // Predicated region
        $region25: #{tpu_custom_call.1} parent=11 // pred_check
          %p218 = pneg %p126
        $region26: #{tpu_custom_call.1} parent=11 // pred_check_branch
          %220 = sbr.rel (%p218) target = $region28
        $region27: #{tpu_custom_call.1} parent=11 // pred_region
          _
        $region28: #{tpu_custom_call.1} parent=11 // pred_fallthru
          _
        // Predicated region
        $region29: #{tpu_custom_call.1} parent=11 // pred_check
          %p221 = pneg %p147
        $region30: #{tpu_custom_call.1} parent=11 // pred_check_branch
          %223 = sbr.rel (%p221) target = $region32
        $region31: #{tpu_custom_call.1} parent=11 // pred_region
          _
        $region32: #{tpu_custom_call.1} parent=11 // pred_fallthru
          _
        // Predicated region
        $region33: #{tpu_custom_call.1} parent=11 // pred_check
          %p224 = pneg %p168
        $region34: #{tpu_custom_call.1} parent=11 // pred_check_branch
          %226 = sbr.rel (%p224) target = $region36
        $region35: #{tpu_custom_call.1} parent=11 // pred_region
          _
        $region36: #{tpu_custom_call.1} parent=11 // pred_fallthru
          _
      $region12: #{tpu_custom_call.1} parent=5 // pred_fallthru
        _
      %p227 = scmp.lt.s32.totalorder %s16, 2
      // Predicated region
      $region37: #{tpu_custom_call.1} parent=5 // pred_check
        %p228 = pneg %p227
      $region38: #{tpu_custom_call.1} parent=5 // pred_check_branch
        %230 = sbr.rel (%p228) target = $region40
      $region39: #{tpu_custom_call.1} parent=5 // pred_region
        // Predicated region
        $region41: #{tpu_custom_call.1} parent=39 // pred_check
          %p231 = pneg %p36
        $region42: #{tpu_custom_call.1} parent=39 // pred_check_branch
          %233 = sbr.rel (%p231) target = $region44
        $region43: #{tpu_custom_call.1} parent=39 // pred_region
          %s234 = smul.u32 2, %s16
          %p235 = scmp.lt.s32.totalorder %s234, 3
          %s236 = scalar_select %p235, %s234, 3
          %s237 = smul.addr %s236, 8
          %s238 = scalar_lea.vmem %s0, %s237
          %s239 = smul.u32 2, %s16
        $region44: #{tpu_custom_call.1} parent=39 // pred_fallthru
          _
      $region40: #{tpu_custom_call.1} parent=5 // pred_fallthru
        _
      %p240 = scmp.le.s32.totalorder 1, %s16
      %p241 = scmp.lt.s32.totalorder %s16, 3
      %p242 = pnand %p240, %p241
      %p243 = pneg %p242
      // Predicated region
      $region45: #{tpu_custom_call.1} parent=5 // pred_check
        _
      $region46: #{tpu_custom_call.1} parent=5 // pred_check_branch
        %245 = sbr.rel (%p242) target = $region48
      $region47: #{tpu_custom_call.1} parent=5 // pred_region
        %s246 = ssub.s32 %s16, 1
        %s247 = smul.u32 2, %s21
        %p248 = scmp.lt.s32.totalorder %s247, 3
        %s249 = scalar_select %p248, %s247, 3
        %s250 = smul.addr %s249, 8
        %s251 = scalar_lea.vmem %s0, %s250
        %p252 = pneg %p42
        %p253 = pneg %p39
        %p254 = pneg %p63
        %p255 = pneg %p60
        %p256 = pneg %p84
        %p257 = pneg %p81
        %p258 = pneg %p105
        %p259 = pneg %p102
        %p260 = pneg %p126
        %p261 = pneg %p123
        %p262 = pneg %p147
        %p263 = pneg %p144
        %p264 = pneg %p168
        %p265 = pneg %p165
        %p266 = pneg %p194
        %p267 = pneg %p191
        %s268 = sand.u32 %s181, 1
        %s269 = scalar_lea.sflag [#allocation3], %s268
        %s270 = sand.u32 %s181, 1
        %s271 = smul.addr %s270, 16
        %s272 = scalar_lea.vmem [#allocation2], %s271
        %s273 = smul.u32 2, %s21
        %p274 = scmp.lt.s32.totalorder %s273, 3
        %s275 = scalar_select %p274, %s273, 3
        %s276 = smul.addr %s275, 8
        %s277 = scalar_lea.vmem %s0, %s276
        %s278 = smul.u32 2, %s21
        %s279 = smul.u32 2, %s21
        %v280 = vld [vmem:[%s277] sm:$0xff]
        %v281 = vld [vmem:[%s277 + $0x8] sm:$0xff]
        %v282 = vld [vmem:[%s1] sm:$0xff]
        %v283 = vld [vmem:[%s1 + $0x8] sm:$0xff]
        %v284 = vld [vmem:[%s1 + $0x10] sm:$0xff]
        %v285 = vld [vmem:[%s1 + $0x18] sm:$0xff]
        %v286 = vld [vmem:[%s2] sm:$0xff]
        %v287 = vld [vmem:[%s2 + $0x8] sm:$0xff]
        %v288 = vld [vmem:[%s2 + $0x10] sm:$0xff]
        %v289 = vld [vmem:[%s2 + $0x18] sm:$0xff]
        %291 = vset.pattern.permute.xlu0 0
        %292 = vperm.xlu0 %291, %v286
        %v293 = vpop.permute.xlu0 %292
        %296 = vset.pattern.permute.xlu0 0
        %297 = vperm.xlu0 %296, %v287
        %v298 = vpop.permute.xlu0 %297
        %301 = vset.pattern.permute.xlu0 0
        %302 = vperm.xlu0 %301, %v288
        %v303 = vpop.permute.xlu0 %302
        %306 = vset.pattern.permute.xlu0 0
        %307 = vperm.xlu0 %306, %v289
        %v308 = vpop.permute.xlu0 %307
        %vm310 = vcmask 64512
        %v312 = vsel %vm310, %v282, 0
        %v315 = vsel %vm310, %v283, 0
        %v318 = vsel %vm310, %v284, 0
        %v321 = vsel %vm310, %v285, 0
        %323 = vmatpush.msra.mxu0 0.0
        %324 = vmatpush.msra.mxu0 0.0
        %325 = vmatpush.msra.mxu0 0.0
        %326 = vmatpush.msra.mxu0 0.0
        %327 = vmatpush.msra.mxu0 0.0
        %328 = vmatpush.msra.mxu0 0.0
        %329 = vmatpush.msra.mxu0 0.0
        %330 = vmatpush.msra.mxu0 0.0
        %331 = vmatpush.msra.mxu0 0.0
        %332 = vmatpush.msra.mxu0 0.0
        %333 = vmatpush.msra.mxu0 0.0
        %334 = vmatpush.msra.mxu0 0.0
        %335 = vmatpush.msra.mxu0 0.0
        %336 = vmatpush.msra.mxu0 0.0
        %337 = vmatpush.msra.mxu0 0.0
        %v338 = vand.u32 %v280, 4294901760
        %339 = vmatpush.msra.mxu0 %v338
        %v340 = vand.u32 %v312, 4294901760
        %v341 = vsub.f32 %v312, %v340
        %v342 = vand.u32 %v341, 4294901760
        %v343 = vsub.f32 %v341, %v342
        %v344 = vand.u32 %v343, 4294901760
        %345 = vmatmul.f32.gmra.mxu0 %v344
        %v346 = vpop.f32.mrf.mxu0
        %v347 = vadd.f32 %v293, %v346
        %v348 = vand.u32 %v315, 4294901760
        %v349 = vsub.f32 %v315, %v348
        %v350 = vand.u32 %v349, 4294901760
        %v351 = vsub.f32 %v349, %v350
        %v352 = vand.u32 %v351, 4294901760
        %353 = vmatmul.f32.gmra.mxu0 %v352
        %v354 = vpop.f32.mrf.mxu0
        %v355 = vadd.f32 %v298, %v354
        %v356 = vand.u32 %v318, 4294901760
        %v357 = vsub.f32 %v318, %v356
        %v358 = vand.u32 %v357, 4294901760
        %v359 = vsub.f32 %v357, %v358
        %v360 = vand.u32 %v359, 4294901760
        %361 = vmatmul.f32.gmra.mxu0 %v360
        %v362 = vpop.f32.mrf.mxu0
        %v363 = vadd.f32 %v303, %v362
        %v364 = vand.u32 %v321, 4294901760
        %v365 = vsub.f32 %v321, %v364
        %v366 = vand.u32 %v365, 4294901760
        %v367 = vsub.f32 %v365, %v366
        %v368 = vand.u32 %v367, 4294901760
        %369 = vmatmul.f32.gmra.mxu0 %v368
        %v370 = vpop.f32.mrf.mxu0
        %v371 = vadd.f32 %v308, %v370
        %372 = vdwg.mxu0
        %373 = vmatpush.msra.mxu0 0.0
        %374 = vmatpush.msra.mxu0 0.0
        %375 = vmatpush.msra.mxu0 0.0
        %376 = vmatpush.msra.mxu0 0.0
        %377 = vmatpush.msra.mxu0 0.0
        %378 = vmatpush.msra.mxu0 0.0
        %379 = vmatpush.msra.mxu0 0.0
        %380 = vmatpush.msra.mxu0 0.0
        %381 = vmatpush.msra.mxu0 0.0
        %382 = vmatpush.msra.mxu0 0.0
        %383 = vmatpush.msra.mxu0 0.0
        %384 = vmatpush.msra.mxu0 0.0
        %385 = vmatpush.msra.mxu0 0.0
        %386 = vmatpush.msra.mxu0 0.0
        %387 = vmatpush.msra.mxu0 0.0
        %v388 = vand.u32 %v280, 4294901760
        %v389 = vsub.f32 %v280, %v388
        %v390 = vand.u32 %v389, 4294901760
        %v391 = vsub.f32 %v389, %v390
        %v392 = vand.u32 %v391, 4294901760
        %393 = vmatpush.msra.mxu0 %v392
        %v394 = vand.u32 %v312, 4294901760
        %395 = vmatmul.f32.gmra.mxu0 %v394
        %v396 = vpop.f32.mrf.mxu0
        %v397 = vadd.f32 %v347, %v396
        %v398 = vand.u32 %v315, 4294901760
        %399 = vmatmul.f32.gmra.mxu0 %v398
        %v400 = vpop.f32.mrf.mxu0
        %v401 = vadd.f32 %v355, %v400
        %v402 = vand.u32 %v318, 4294901760
        %403 = vmatmul.f32.gmra.mxu0 %v402
        %v404 = vpop.f32.mrf.mxu0
        %v405 = vadd.f32 %v363, %v404
        %v406 = vand.u32 %v321, 4294901760
        %407 = vmatmul.f32.gmra.mxu0 %v406
        %v408 = vpop.f32.mrf.mxu0
        %v409 = vadd.f32 %v371, %v408
        %410 = vdwg.mxu0
        %411 = vmatpush.msra.mxu0 0.0
        %412 = vmatpush.msra.mxu0 0.0
        %413 = vmatpush.msra.mxu0 0.0
        %414 = vmatpush.msra.mxu0 0.0
        %415 = vmatpush.msra.mxu0 0.0
        %416 = vmatpush.msra.mxu0 0.0
        %417 = vmatpush.msra.mxu0 0.0
        %418 = vmatpush.msra.mxu0 0.0
        %419 = vmatpush.msra.mxu0 0.0
        %420 = vmatpush.msra.mxu0 0.0
        %421 = vmatpush.msra.mxu0 0.0
        %422 = vmatpush.msra.mxu0 0.0
        %423 = vmatpush.msra.mxu0 0.0
        %424 = vmatpush.msra.mxu0 0.0
        %425 = vmatpush.msra.mxu0 0.0
        %v426 = vand.u32 %v280, 4294901760
        %v427 = vsub.f32 %v280, %v426
        %428 = vmatpush.msra.mxu0 %v427
        %v429 = vand.u32 %v312, 4294901760
        %v430 = vsub.f32 %v312, %v429
        %431 = vmatmul.f32.gmra.mxu0 %v430
        %v432 = vpop.f32.mrf.mxu0
        %v433 = vadd.f32 %v397, %v432
        %v434 = vand.u32 %v315, 4294901760
        %v435 = vsub.f32 %v315, %v434
        %436 = vmatmul.f32.gmra.mxu0 %v435
        %v437 = vpop.f32.mrf.mxu0
        %v438 = vadd.f32 %v401, %v437
        %v439 = vand.u32 %v318, 4294901760
        %v440 = vsub.f32 %v318, %v439
        %441 = vmatmul.f32.gmra.mxu0 %v440
        %v442 = vpop.f32.mrf.mxu0
        %v443 = vadd.f32 %v405, %v442
        %v444 = vand.u32 %v321, 4294901760
        %v445 = vsub.f32 %v321, %v444
        %446 = vmatmul.f32.gmra.mxu0 %v445
        %v447 = vpop.f32.mrf.mxu0
        %v448 = vadd.f32 %v409, %v447
        %449 = vdwg.mxu0
        %450 = vmatpush.msra.mxu0 0.0
        %451 = vmatpush.msra.mxu0 0.0
        %452 = vmatpush.msra.mxu0 0.0
        %453 = vmatpush.msra.mxu0 0.0
        %454 = vmatpush.msra.mxu0 0.0
        %455 = vmatpush.msra.mxu0 0.0
        %456 = vmatpush.msra.mxu0 0.0
        %457 = vmatpush.msra.mxu0 0.0
        %458 = vmatpush.msra.mxu0 0.0
        %459 = vmatpush.msra.mxu0 0.0
        %460 = vmatpush.msra.mxu0 0.0
        %461 = vmatpush.msra.mxu0 0.0
        %462 = vmatpush.msra.mxu0 0.0
        %463 = vmatpush.msra.mxu0 0.0
        %464 = vmatpush.msra.mxu0 0.0
        %v465 = vand.u32 %v280, 4294901760
        %466 = vmatpush.msra.mxu0 %v465
        %v467 = vand.u32 %v312, 4294901760
        %v468 = vsub.f32 %v312, %v467
        %v469 = vand.u32 %v468, 4294901760
        %470 = vmatmul.f32.gmra.mxu0 %v469
        %v471 = vpop.f32.mrf.mxu0
        %v472 = vadd.f32 %v433, %v471
        %v473 = vand.u32 %v315, 4294901760
        %v474 = vsub.f32 %v315, %v473
        %v475 = vand.u32 %v474, 4294901760
        %476 = vmatmul.f32.gmra.mxu0 %v475
        %v477 = vpop.f32.mrf.mxu0
        %v478 = vadd.f32 %v438, %v477
        %v479 = vand.u32 %v318, 4294901760
        %v480 = vsub.f32 %v318, %v479
        %v481 = vand.u32 %v480, 4294901760
        %482 = vmatmul.f32.gmra.mxu0 %v481
        %v483 = vpop.f32.mrf.mxu0
        %v484 = vadd.f32 %v443, %v483
        %v485 = vand.u32 %v321, 4294901760
        %v486 = vsub.f32 %v321, %v485
        %v487 = vand.u32 %v486, 4294901760
        %488 = vmatmul.f32.gmra.mxu0 %v487
        %v489 = vpop.f32.mrf.mxu0
        %v490 = vadd.f32 %v448, %v489
        %491 = vdwg.mxu0
        %492 = vmatpush.msra.mxu0 0.0
        %493 = vmatpush.msra.mxu0 0.0
        %494 = vmatpush.msra.mxu0 0.0
        %495 = vmatpush.msra.mxu0 0.0
        %496 = vmatpush.msra.mxu0 0.0
        %497 = vmatpush.msra.mxu0 0.0
        %498 = vmatpush.msra.mxu0 0.0
        %499 = vmatpush.msra.mxu0 0.0
        %500 = vmatpush.msra.mxu0 0.0
        %501 = vmatpush.msra.mxu0 0.0
        %502 = vmatpush.msra.mxu0 0.0
        %503 = vmatpush.msra.mxu0 0.0
        %504 = vmatpush.msra.mxu0 0.0
        %505 = vmatpush.msra.mxu0 0.0
        %506 = vmatpush.msra.mxu0 0.0
        %v507 = vand.u32 %v280, 4294901760
        %v508 = vsub.f32 %v280, %v507
        %v509 = vand.u32 %v508, 4294901760
        %510 = vmatpush.msra.mxu0 %v509
        %v511 = vand.u32 %v312, 4294901760
        %512 = vmatmul.f32.gmra.mxu0 %v511
        %v513 = vpop.f32.mrf.mxu0
        %v514 = vadd.f32 %v472, %v513
        %v515 = vand.u32 %v315, 4294901760
        %516 = vmatmul.f32.gmra.mxu0 %v515
        %v517 = vpop.f32.mrf.mxu0
        %v518 = vadd.f32 %v478, %v517
        %v519 = vand.u32 %v318, 4294901760
        %520 = vmatmul.f32.gmra.mxu0 %v519
        %v521 = vpop.f32.mrf.mxu0
        %v522 = vadd.f32 %v484, %v521
        %v523 = vand.u32 %v321, 4294901760
        %524 = vmatmul.f32.gmra.mxu0 %v523
        %v525 = vpop.f32.mrf.mxu0
        %v526 = vadd.f32 %v490, %v525
        %527 = vdwg.mxu0
        %528 = vmatpush.msra.mxu0 0.0
        %529 = vmatpush.msra.mxu0 0.0
        %530 = vmatpush.msra.mxu0 0.0
        %531 = vmatpush.msra.mxu0 0.0
        %532 = vmatpush.msra.mxu0 0.0
        %533 = vmatpush.msra.mxu0 0.0
        %534 = vmatpush.msra.mxu0 0.0
        %535 = vmatpush.msra.mxu0 0.0
        %536 = vmatpush.msra.mxu0 0.0
        %537 = vmatpush.msra.mxu0 0.0
        %538 = vmatpush.msra.mxu0 0.0
        %539 = vmatpush.msra.mxu0 0.0
        %540 = vmatpush.msra.mxu0 0.0
        %541 = vmatpush.msra.mxu0 0.0
        %542 = vmatpush.msra.mxu0 0.0
        %v543 = vand.u32 %v280, 4294901760
        %544 = vmatpush.msra.mxu0 %v543
        %v545 = vand.u32 %v312, 4294901760
        %546 = vmatmul.f32.gmra.mxu0 %v545
        %v547 = vpop.f32.mrf.mxu0
        %v548 = vadd.f32 %v514, %v547
        %v549 = vand.u32 %v315, 4294901760
        %550 = vmatmul.f32.gmra.mxu0 %v549
        %v551 = vpop.f32.mrf.mxu0
        %v552 = vadd.f32 %v518, %v551
        %v553 = vand.u32 %v318, 4294901760
        %554 = vmatmul.f32.gmra.mxu0 %v553
        %v555 = vpop.f32.mrf.mxu0
        %v556 = vadd.f32 %v522, %v555
        %v557 = vand.u32 %v321, 4294901760
        %558 = vmatmul.f32.gmra.mxu0 %v557
        %v559 = vpop.f32.mrf.mxu0
        %v560 = vadd.f32 %v526, %v559
        %561 = vdwg.mxu0
        %562 = vmatpush.msra.mxu0 0.0
        %563 = vmatpush.msra.mxu0 0.0
        %564 = vmatpush.msra.mxu0 0.0
        %565 = vmatpush.msra.mxu0 0.0
        %566 = vmatpush.msra.mxu0 0.0
        %567 = vmatpush.msra.mxu0 0.0
        %568 = vmatpush.msra.mxu0 0.0
        %569 = vmatpush.msra.mxu0 0.0
        %570 = vmatpush.msra.mxu0 0.0
        %571 = vmatpush.msra.mxu0 0.0
        %572 = vmatpush.msra.mxu0 0.0
        %573 = vmatpush.msra.mxu0 0.0
        %574 = vmatpush.msra.mxu0 0.0
        %575 = vmatpush.msra.mxu0 0.0
        %576 = vmatpush.msra.mxu0 0.0
        %v577 = vand.u32 %v281, 4294901760
        %578 = vmatpush.msra.mxu0 %v577
        %v579 = vand.u32 %v312, 4294901760
        %v580 = vsub.f32 %v312, %v579
        %v581 = vand.u32 %v580, 4294901760
        %v582 = vsub.f32 %v580, %v581
        %v583 = vand.u32 %v582, 4294901760
        %584 = vmatmul.f32.gmra.mxu0 %v583
        %v585 = vpop.f32.mrf.mxu0
        %v586 = vadd.f32 %v293, %v585
        %v587 = vand.u32 %v315, 4294901760
        %v588 = vsub.f32 %v315, %v587
        %v589 = vand.u32 %v588, 4294901760
        %v590 = vsub.f32 %v588, %v589
        %v591 = vand.u32 %v590, 4294901760
        %592 = vmatmul.f32.gmra.mxu0 %v591
        %v593 = vpop.f32.mrf.mxu0
        %v594 = vadd.f32 %v298, %v593
        %v595 = vand.u32 %v318, 4294901760
        %v596 = vsub.f32 %v318, %v595
        %v597 = vand.u32 %v596, 4294901760
        %v598 = vsub.f32 %v596, %v597
        %v599 = vand.u32 %v598, 4294901760
        %600 = vmatmul.f32.gmra.mxu0 %v599
        %v601 = vpop.f32.mrf.mxu0
        %v602 = vadd.f32 %v303, %v601
        %v603 = vand.u32 %v321, 4294901760
        %v604 = vsub.f32 %v321, %v603
        %v605 = vand.u32 %v604, 4294901760
        %v606 = vsub.f32 %v604, %v605
        %v607 = vand.u32 %v606, 4294901760
        %608 = vmatmul.f32.gmra.mxu0 %v607
        %v609 = vpop.f32.mrf.mxu0
        %v610 = vadd.f32 %v308, %v609
        %611 = vdwg.mxu0
        %612 = vmatpush.msra.mxu0 0.0
        %613 = vmatpush.msra.mxu0 0.0
        %614 = vmatpush.msra.mxu0 0.0
        %615 = vmatpush.msra.mxu0 0.0
        %616 = vmatpush.msra.mxu0 0.0
        %617 = vmatpush.msra.mxu0 0.0
        %618 = vmatpush.msra.mxu0 0.0
        %619 = vmatpush.msra.mxu0 0.0
        %620 = vmatpush.msra.mxu0 0.0
        %621 = vmatpush.msra.mxu0 0.0
        %622 = vmatpush.msra.mxu0 0.0
        %623 = vmatpush.msra.mxu0 0.0
        %624 = vmatpush.msra.mxu0 0.0
        %625 = vmatpush.msra.mxu0 0.0
        %626 = vmatpush.msra.mxu0 0.0
        %v627 = vand.u32 %v281, 4294901760
        %v628 = vsub.f32 %v281, %v627
        %v629 = vand.u32 %v628, 4294901760
        %v630 = vsub.f32 %v628, %v629
        %v631 = vand.u32 %v630, 4294901760
        %632 = vmatpush.msra.mxu0 %v631
        %v633 = vand.u32 %v312, 4294901760
        %634 = vmatmul.f32.gmra.mxu0 %v633
        %v635 = vpop.f32.mrf.mxu0
        %v636 = vadd.f32 %v586, %v635
        %v637 = vand.u32 %v315, 4294901760
        %638 = vmatmul.f32.gmra.mxu0 %v637
        %v639 = vpop.f32.mrf.mxu0
        %v640 = vadd.f32 %v594, %v639
        %v641 = vand.u32 %v318, 4294901760
        %642 = vmatmul.f32.gmra.mxu0 %v641
        %v643 = vpop.f32.mrf.mxu0
        %v644 = vadd.f32 %v602, %v643
        %v645 = vand.u32 %v321, 4294901760
        %646 = vmatmul.f32.gmra.mxu0 %v645
        %v647 = vpop.f32.mrf.mxu0
        %v648 = vadd.f32 %v610, %v647
        %649 = vdwg.mxu0
        %650 = vmatpush.msra.mxu0 0.0
        %651 = vmatpush.msra.mxu0 0.0
        %652 = vmatpush.msra.mxu0 0.0
        %653 = vmatpush.msra.mxu0 0.0
        %654 = vmatpush.msra.mxu0 0.0
        %655 = vmatpush.msra.mxu0 0.0
        %656 = vmatpush.msra.mxu0 0.0
        %657 = vmatpush.msra.mxu0 0.0
        %658 = vmatpush.msra.mxu0 0.0
        %659 = vmatpush.msra.mxu0 0.0
        %660 = vmatpush.msra.mxu0 0.0
        %661 = vmatpush.msra.mxu0 0.0
        %662 = vmatpush.msra.mxu0 0.0
        %663 = vmatpush.msra.mxu0 0.0
        %664 = vmatpush.msra.mxu0 0.0
        %v665 = vand.u32 %v281, 4294901760
        %v666 = vsub.f32 %v281, %v665
        %667 = vmatpush.msra.mxu0 %v666
        %v668 = vand.u32 %v312, 4294901760
        %v669 = vsub.f32 %v312, %v668
        %670 = vmatmul.f32.gmra.mxu0 %v669
        %v671 = vpop.f32.mrf.mxu0
        %v672 = vadd.f32 %v636, %v671
        %v673 = vand.u32 %v315, 4294901760
        %v674 = vsub.f32 %v315, %v673
        %675 = vmatmul.f32.gmra.mxu0 %v674
        %v676 = vpop.f32.mrf.mxu0
        %v677 = vadd.f32 %v640, %v676
        %v678 = vand.u32 %v318, 4294901760
        %v679 = vsub.f32 %v318, %v678
        %680 = vmatmul.f32.gmra.mxu0 %v679
        %v681 = vpop.f32.mrf.mxu0
        %v682 = vadd.f32 %v644, %v681
        %v683 = vand.u32 %v321, 4294901760
        %v684 = vsub.f32 %v321, %v683
        %685 = vmatmul.f32.gmra.mxu0 %v684
        %v686 = vpop.f32.mrf.mxu0
        %v687 = vadd.f32 %v648, %v686
        %688 = vdwg.mxu0
        %689 = vmatpush.msra.mxu0 0.0
        %690 = vmatpush.msra.mxu0 0.0
        %691 = vmatpush.msra.mxu0 0.0
        %692 = vmatpush.msra.mxu0 0.0
        %693 = vmatpush.msra.mxu0 0.0
        %694 = vmatpush.msra.mxu0 0.0
        %695 = vmatpush.msra.mxu0 0.0
        %696 = vmatpush.msra.mxu0 0.0
        %697 = vmatpush.msra.mxu0 0.0
        %698 = vmatpush.msra.mxu0 0.0
        %699 = vmatpush.msra.mxu0 0.0
        %700 = vmatpush.msra.mxu0 0.0
        %701 = vmatpush.msra.mxu0 0.0
        %702 = vmatpush.msra.mxu0 0.0
        %703 = vmatpush.msra.mxu0 0.0
        %v704 = vand.u32 %v281, 4294901760
        %705 = vmatpush.msra.mxu0 %v704
        %v706 = vand.u32 %v312, 4294901760
        %v707 = vsub.f32 %v312, %v706
        %v708 = vand.u32 %v707, 4294901760
        %709 = vmatmul.f32.gmra.mxu0 %v708
        %v710 = vpop.f32.mrf.mxu0
        %v711 = vadd.f32 %v672, %v710
        %v712 = vand.u32 %v315, 4294901760
        %v713 = vsub.f32 %v315, %v712
        %v714 = vand.u32 %v713, 4294901760
        %715 = vmatmul.f32.gmra.mxu0 %v714
        %v716 = vpop.f32.mrf.mxu0
        %v717 = vadd.f32 %v677, %v716
        %v718 = vand.u32 %v318, 4294901760
        %v719 = vsub.f32 %v318, %v718
        %v720 = vand.u32 %v719, 4294901760
        %721 = vmatmul.f32.gmra.mxu0 %v720
        %v722 = vpop.f32.mrf.mxu0
        %v723 = vadd.f32 %v682, %v722
        %v724 = vand.u32 %v321, 4294901760
        %v725 = vsub.f32 %v321, %v724
        %v726 = vand.u32 %v725, 4294901760
        %727 = vmatmul.f32.gmra.mxu0 %v726
        %v728 = vpop.f32.mrf.mxu0
        %v729 = vadd.f32 %v687, %v728
        %730 = vdwg.mxu0
        %731 = vmatpush.msra.mxu0 0.0
        %732 = vmatpush.msra.mxu0 0.0
        %733 = vmatpush.msra.mxu0 0.0
        %734 = vmatpush.msra.mxu0 0.0
        %735 = vmatpush.msra.mxu0 0.0
        %736 = vmatpush.msra.mxu0 0.0
        %737 = vmatpush.msra.mxu0 0.0
        %738 = vmatpush.msra.mxu0 0.0
        %739 = vmatpush.msra.mxu0 0.0
        %740 = vmatpush.msra.mxu0 0.0
        %741 = vmatpush.msra.mxu0 0.0
        %742 = vmatpush.msra.mxu0 0.0
        %743 = vmatpush.msra.mxu0 0.0
        %744 = vmatpush.msra.mxu0 0.0
        %745 = vmatpush.msra.mxu0 0.0
        %v746 = vand.u32 %v281, 4294901760
        %v747 = vsub.f32 %v281, %v746
        %v748 = vand.u32 %v747, 4294901760
        %749 = vmatpush.msra.mxu0 %v748
        %v750 = vand.u32 %v312, 4294901760
        %751 = vmatmul.f32.gmra.mxu0 %v750
        %v752 = vpop.f32.mrf.mxu0
        %v753 = vadd.f32 %v711, %v752
        %v754 = vand.u32 %v315, 4294901760
        %755 = vmatmul.f32.gmra.mxu0 %v754
        %v756 = vpop.f32.mrf.mxu0
        %v757 = vadd.f32 %v717, %v756
        %v758 = vand.u32 %v318, 4294901760
        %759 = vmatmul.f32.gmra.mxu0 %v758
        %v760 = vpop.f32.mrf.mxu0
        %v761 = vadd.f32 %v723, %v760
        %v762 = vand.u32 %v321, 4294901760
        %763 = vmatmul.f32.gmra.mxu0 %v762
        %v764 = vpop.f32.mrf.mxu0
        %v765 = vadd.f32 %v729, %v764
        %766 = vdwg.mxu0
        %767 = vmatpush.msra.mxu0 0.0
        %768 = vmatpush.msra.mxu0 0.0
        %769 = vmatpush.msra.mxu0 0.0
        %770 = vmatpush.msra.mxu0 0.0
        %771 = vmatpush.msra.mxu0 0.0
        %772 = vmatpush.msra.mxu0 0.0
        %773 = vmatpush.msra.mxu0 0.0
        %774 = vmatpush.msra.mxu0 0.0
        %775 = vmatpush.msra.mxu0 0.0
        %776 = vmatpush.msra.mxu0 0.0
        %777 = vmatpush.msra.mxu0 0.0
        %778 = vmatpush.msra.mxu0 0.0
        %779 = vmatpush.msra.mxu0 0.0
        %780 = vmatpush.msra.mxu0 0.0
        %781 = vmatpush.msra.mxu0 0.0
        %v782 = vand.u32 %v281, 4294901760
        %783 = vmatpush.msra.mxu0 %v782
        %v784 = vand.u32 %v312, 4294901760
        %785 = vmatmul.f32.gmra.mxu0 %v784
        %v786 = vpop.f32.mrf.mxu0
        %v787 = vadd.f32 %v753, %v786
        %v788 = vand.u32 %v315, 4294901760
        %789 = vmatmul.f32.gmra.mxu0 %v788
        %v790 = vpop.f32.mrf.mxu0
        %v791 = vadd.f32 %v757, %v790
        %v792 = vand.u32 %v318, 4294901760
        %793 = vmatmul.f32.gmra.mxu0 %v792
        %v794 = vpop.f32.mrf.mxu0
        %v795 = vadd.f32 %v761, %v794
        %v796 = vand.u32 %v321, 4294901760
        %797 = vmatmul.f32.gmra.mxu0 %v796
        %v798 = vpop.f32.mrf.mxu0
        %v799 = vadd.f32 %v765, %v798
        %800 = vdwg.mxu0
        %v801 = vmax.f32 %v548, 0.0
        %v802 = vmax.f32 %v787, 0.0
        %v803 = vmax.f32 %v552, 0.0
        %v804 = vmax.f32 %v791, 0.0
        %v805 = vmax.f32 %v556, 0.0
        %v806 = vmax.f32 %v795, 0.0
        %v807 = vmax.f32 %v560, 0.0
        %v808 = vmax.f32 %v799, 0.0
        %v809 = vld [vmem:[%s3] sm:$0xff]
        %v810 = vld [vmem:[%s3 + $0x8] sm:$0xff]
        %v811 = vld [vmem:[%s3 + $0x10] sm:$0xff]
        %v812 = vld [vmem:[%s3 + $0x18] sm:$0xff]
        %v813 = vld [vmem:[%s4] sm:$0xff]
        %v814 = vld [vmem:[%s4 + $0x8] sm:$0xff]
        %v815 = vld [vmem:[%s4 + $0x10] sm:$0xff]
        %v816 = vld [vmem:[%s4 + $0x18] sm:$0xff]
        %818 = vset.pattern.permute.xlu0 0
        %819 = vperm.xlu0 %818, %v813
        %v820 = vpop.permute.xlu0 %819
        %823 = vset.pattern.permute.xlu0 0
        %824 = vperm.xlu0 %823, %v814
        %v825 = vpop.permute.xlu0 %824
        %828 = vset.pattern.permute.xlu0 0
        %829 = vperm.xlu0 %828, %v815
        %v830 = vpop.permute.xlu0 %829
        %833 = vset.pattern.permute.xlu0 0
        %834 = vperm.xlu0 %833, %v816
        %v835 = vpop.permute.xlu0 %834
        %vm837 = vcmask 261120
        %v839 = vsel %vm837, %v809, 0
        %v842 = vsel %vm837, %v810, 0
        %v845 = vsel %vm837, %v811, 0
        %v848 = vsel %vm837, %v812, 0
        %850 = vmatpush.msra.mxu0 0.0
        %851 = vmatpush.msra.mxu0 0.0
        %852 = vmatpush.msra.mxu0 0.0
        %853 = vmatpush.msra.mxu0 0.0
        %854 = vmatpush.msra.mxu0 0.0
        %855 = vmatpush.msra.mxu0 0.0
        %856 = vmatpush.msra.mxu0 0.0
        %857 = vmatpush.msra.mxu0 0.0
        %858 = vmatpush.msra.mxu0 0.0
        %859 = vmatpush.msra.mxu0 0.0
        %860 = vmatpush.msra.mxu0 0.0
        %861 = vmatpush.msra.mxu0 0.0
        %v862 = vand.u32 %v807, 4294901760
        %863 = vmatpush.msra.mxu0 %v862
        %v864 = vand.u32 %v805, 4294901760
        %865 = vmatpush.msra.mxu0 %v864
        %v866 = vand.u32 %v803, 4294901760
        %867 = vmatpush.msra.mxu0 %v866
        %v868 = vand.u32 %v801, 4294901760
        %869 = vmatpush.msra.mxu0 %v868
        %v870 = vand.u32 %v839, 4294901760
        %v871 = vsub.f32 %v839, %v870
        %v872 = vand.u32 %v871, 4294901760
        %v873 = vsub.f32 %v871, %v872
        %v874 = vand.u32 %v873, 4294901760
        %875 = vmatmul.f32.gmra.mxu0 %v874
        %v876 = vpop.f32.mrf.mxu0
        %v877 = vadd.f32 %v820, %v876
        %v878 = vand.u32 %v842, 4294901760
        %v879 = vsub.f32 %v842, %v878
        %v880 = vand.u32 %v879, 4294901760
        %v881 = vsub.f32 %v879, %v880
        %v882 = vand.u32 %v881, 4294901760
        %883 = vmatmul.f32.gmra.mxu0 %v882
        %v884 = vpop.f32.mrf.mxu0
        %v885 = vadd.f32 %v825, %v884
        %v886 = vand.u32 %v845, 4294901760
        %v887 = vsub.f32 %v845, %v886
        %v888 = vand.u32 %v887, 4294901760
        %v889 = vsub.f32 %v887, %v888
        %v890 = vand.u32 %v889, 4294901760
        %891 = vmatmul.f32.gmra.mxu0 %v890
        %v892 = vpop.f32.mrf.mxu0
        %v893 = vadd.f32 %v830, %v892
        %v894 = vand.u32 %v848, 4294901760
        %v895 = vsub.f32 %v848, %v894
        %v896 = vand.u32 %v895, 4294901760
        %v897 = vsub.f32 %v895, %v896
        %v898 = vand.u32 %v897, 4294901760
        %899 = vmatmul.f32.gmra.mxu0 %v898
        %v900 = vpop.f32.mrf.mxu0
        %v901 = vadd.f32 %v835, %v900
        %902 = vdwg.mxu0
        %903 = vmatpush.msra.mxu0 0.0
        %904 = vmatpush.msra.mxu0 0.0
        %905 = vmatpush.msra.mxu0 0.0
        %906 = vmatpush.msra.mxu0 0.0
        %907 = vmatpush.msra.mxu0 0.0
        %908 = vmatpush.msra.mxu0 0.0
        %909 = vmatpush.msra.mxu0 0.0
        %910 = vmatpush.msra.mxu0 0.0
        %911 = vmatpush.msra.mxu0 0.0
        %912 = vmatpush.msra.mxu0 0.0
        %913 = vmatpush.msra.mxu0 0.0
        %914 = vmatpush.msra.mxu0 0.0
        %v915 = vand.u32 %v807, 4294901760
        %v916 = vsub.f32 %v807, %v915
        %v917 = vand.u32 %v916, 4294901760
        %v918 = vsub.f32 %v916, %v917
        %v919 = vand.u32 %v918, 4294901760
        %920 = vmatpush.msra.mxu0 %v919
        %v921 = vand.u32 %v805, 4294901760
        %v922 = vsub.f32 %v805, %v921
        %v923 = vand.u32 %v922, 4294901760
        %v924 = vsub.f32 %v922, %v923
        %v925 = vand.u32 %v924, 4294901760
        %926 = vmatpush.msra.mxu0 %v925
        %v927 = vand.u32 %v803, 4294901760
        %v928 = vsub.f32 %v803, %v927
        %v929 = vand.u32 %v928, 4294901760
        %v930 = vsub.f32 %v928, %v929
        %v931 = vand.u32 %v930, 4294901760
        %932 = vmatpush.msra.mxu0 %v931
        %v933 = vand.u32 %v801, 4294901760
        %v934 = vsub.f32 %v801, %v933
        %v935 = vand.u32 %v934, 4294901760
        %v936 = vsub.f32 %v934, %v935
        %v937 = vand.u32 %v936, 4294901760
        %938 = vmatpush.msra.mxu0 %v937
        %v939 = vand.u32 %v839, 4294901760
        %940 = vmatmul.f32.gmra.mxu0 %v939
        %v941 = vpop.f32.mrf.mxu0
        %v942 = vadd.f32 %v877, %v941
        %v943 = vand.u32 %v842, 4294901760
        %944 = vmatmul.f32.gmra.mxu0 %v943
        %v945 = vpop.f32.mrf.mxu0
        %v946 = vadd.f32 %v885, %v945
        %v947 = vand.u32 %v845, 4294901760
        %948 = vmatmul.f32.gmra.mxu0 %v947
        %v949 = vpop.f32.mrf.mxu0
        %v950 = vadd.f32 %v893, %v949
        %v951 = vand.u32 %v848, 4294901760
        %952 = vmatmul.f32.gmra.mxu0 %v951
        %v953 = vpop.f32.mrf.mxu0
        %v954 = vadd.f32 %v901, %v953
        %955 = vdwg.mxu0
        %956 = vmatpush.msra.mxu0 0.0
        %957 = vmatpush.msra.mxu0 0.0
        %958 = vmatpush.msra.mxu0 0.0
        %959 = vmatpush.msra.mxu0 0.0
        %960 = vmatpush.msra.mxu0 0.0
        %961 = vmatpush.msra.mxu0 0.0
        %962 = vmatpush.msra.mxu0 0.0
        %963 = vmatpush.msra.mxu0 0.0
        %964 = vmatpush.msra.mxu0 0.0
        %965 = vmatpush.msra.mxu0 0.0
        %966 = vmatpush.msra.mxu0 0.0
        %967 = vmatpush.msra.mxu0 0.0
        %v968 = vand.u32 %v807, 4294901760
        %v969 = vsub.f32 %v807, %v968
        %970 = vmatpush.msra.mxu0 %v969
        %v971 = vand.u32 %v805, 4294901760
        %v972 = vsub.f32 %v805, %v971
        %973 = vmatpush.msra.mxu0 %v972
        %v974 = vand.u32 %v803, 4294901760
        %v975 = vsub.f32 %v803, %v974
        %976 = vmatpush.msra.mxu0 %v975
        %v977 = vand.u32 %v801, 4294901760
        %v978 = vsub.f32 %v801, %v977
        %979 = vmatpush.msra.mxu0 %v978
        %v980 = vand.u32 %v839, 4294901760
        %v981 = vsub.f32 %v839, %v980
        %982 = vmatmul.f32.gmra.mxu0 %v981
        %v983 = vpop.f32.mrf.mxu0
        %v984 = vadd.f32 %v942, %v983
        %v985 = vand.u32 %v842, 4294901760
        %v986 = vsub.f32 %v842, %v985
        %987 = vmatmul.f32.gmra.mxu0 %v986
        %v988 = vpop.f32.mrf.mxu0
        %v989 = vadd.f32 %v946, %v988
        %v990 = vand.u32 %v845, 4294901760
        %v991 = vsub.f32 %v845, %v990
        %992 = vmatmul.f32.gmra.mxu0 %v991
        %v993 = vpop.f32.mrf.mxu0
        %v994 = vadd.f32 %v950, %v993
        %v995 = vand.u32 %v848, 4294901760
        %v996 = vsub.f32 %v848, %v995
        %997 = vmatmul.f32.gmra.mxu0 %v996
        %v998 = vpop.f32.mrf.mxu0
        %v999 = vadd.f32 %v954, %v998
        %1000 = vdwg.mxu0
        %1001 = vmatpush.msra.mxu0 0.0
        %1002 = vmatpush.msra.mxu0 0.0
        %1003 = vmatpush.msra.mxu0 0.0
        %1004 = vmatpush.msra.mxu0 0.0
        %1005 = vmatpush.msra.mxu0 0.0
        %1006 = vmatpush.msra.mxu0 0.0
        %1007 = vmatpush.msra.mxu0 0.0
        %1008 = vmatpush.msra.mxu0 0.0
        %1009 = vmatpush.msra.mxu0 0.0
        %1010 = vmatpush.msra.mxu0 0.0
        %1011 = vmatpush.msra.mxu0 0.0
        %1012 = vmatpush.msra.mxu0 0.0
        %v1013 = vand.u32 %v807, 4294901760
        %1014 = vmatpush.msra.mxu0 %v1013
        %v1015 = vand.u32 %v805, 4294901760
        %1016 = vmatpush.msra.mxu0 %v1015
        %v1017 = vand.u32 %v803, 4294901760
        %1018 = vmatpush.msra.mxu0 %v1017
        %v1019 = vand.u32 %v801, 4294901760
        %1020 = vmatpush.msra.mxu0 %v1019
        %v1021 = vand.u32 %v839, 4294901760
        %v1022 = vsub.f32 %v839, %v1021
        %v1023 = vand.u32 %v1022, 4294901760
        %1024 = vmatmul.f32.gmra.mxu0 %v1023
        %v1025 = vpop.f32.mrf.mxu0
        %v1026 = vadd.f32 %v984, %v1025
        %v1027 = vand.u32 %v842, 4294901760
        %v1028 = vsub.f32 %v842, %v1027
        %v1029 = vand.u32 %v1028, 4294901760
        %1030 = vmatmul.f32.gmra.mxu0 %v1029
        %v1031 = vpop.f32.mrf.mxu0
        %v1032 = vadd.f32 %v989, %v1031
        %v1033 = vand.u32 %v845, 4294901760
        %v1034 = vsub.f32 %v845, %v1033
        %v1035 = vand.u32 %v1034, 4294901760
        %1036 = vmatmul.f32.gmra.mxu0 %v1035
        %v1037 = vpop.f32.mrf.mxu0
        %v1038 = vadd.f32 %v994, %v1037
        %v1039 = vand.u32 %v848, 4294901760
        %v1040 = vsub.f32 %v848, %v1039
        %v1041 = vand.u32 %v1040, 4294901760
        %1042 = vmatmul.f32.gmra.mxu0 %v1041
        %v1043 = vpop.f32.mrf.mxu0
        %v1044 = vadd.f32 %v999, %v1043
        %1045 = vdwg.mxu0
        %1046 = vmatpush.msra.mxu0 0.0
        %1047 = vmatpush.msra.mxu0 0.0
        %1048 = vmatpush.msra.mxu0 0.0
        %1049 = vmatpush.msra.mxu0 0.0
        %1050 = vmatpush.msra.mxu0 0.0
        %1051 = vmatpush.msra.mxu0 0.0
        %1052 = vmatpush.msra.mxu0 0.0
        %1053 = vmatpush.msra.mxu0 0.0
        %1054 = vmatpush.msra.mxu0 0.0
        %1055 = vmatpush.msra.mxu0 0.0
        %1056 = vmatpush.msra.mxu0 0.0
        %1057 = vmatpush.msra.mxu0 0.0
        %v1058 = vand.u32 %v807, 4294901760
        %v1059 = vsub.f32 %v807, %v1058
        %v1060 = vand.u32 %v1059, 4294901760
        %1061 = vmatpush.msra.mxu0 %v1060
        %v1062 = vand.u32 %v805, 4294901760
        %v1063 = vsub.f32 %v805, %v1062
        %v1064 = vand.u32 %v1063, 4294901760
        %1065 = vmatpush.msra.mxu0 %v1064
        %v1066 = vand.u32 %v803, 4294901760
        %v1067 = vsub.f32 %v803, %v1066
        %v1068 = vand.u32 %v1067, 4294901760
        %1069 = vmatpush.msra.mxu0 %v1068
        %v1070 = vand.u32 %v801, 4294901760
        %v1071 = vsub.f32 %v801, %v1070
        %v1072 = vand.u32 %v1071, 4294901760
        %1073 = vmatpush.msra.mxu0 %v1072
        %v1074 = vand.u32 %v839, 4294901760
        %1075 = vmatmul.f32.gmra.mxu0 %v1074
        %v1076 = vpop.f32.mrf.mxu0
        %v1077 = vadd.f32 %v1026, %v1076
        %v1078 = vand.u32 %v842, 4294901760
        %1079 = vmatmul.f32.gmra.mxu0 %v1078
        %v1080 = vpop.f32.mrf.mxu0
        %v1081 = vadd.f32 %v1032, %v1080
        %v1082 = vand.u32 %v845, 4294901760
        %1083 = vmatmul.f32.gmra.mxu0 %v1082
        %v1084 = vpop.f32.mrf.mxu0
        %v1085 = vadd.f32 %v1038, %v1084
        %v1086 = vand.u32 %v848, 4294901760
        %1087 = vmatmul.f32.gmra.mxu0 %v1086
        %v1088 = vpop.f32.mrf.mxu0
        %v1089 = vadd.f32 %v1044, %v1088
        %1090 = vdwg.mxu0
        %1091 = vmatpush.msra.mxu0 0.0
        %1092 = vmatpush.msra.mxu0 0.0
        %1093 = vmatpush.msra.mxu0 0.0
        %1094 = vmatpush.msra.mxu0 0.0
        %1095 = vmatpush.msra.mxu0 0.0
        %1096 = vmatpush.msra.mxu0 0.0
        %1097 = vmatpush.msra.mxu0 0.0
        %1098 = vmatpush.msra.mxu0 0.0
        %1099 = vmatpush.msra.mxu0 0.0
        %1100 = vmatpush.msra.mxu0 0.0
        %1101 = vmatpush.msra.mxu0 0.0
        %1102 = vmatpush.msra.mxu0 0.0
        %v1103 = vand.u32 %v807, 4294901760
        %1104 = vmatpush.msra.mxu0 %v1103
        %v1105 = vand.u32 %v805, 4294901760
        %1106 = vmatpush.msra.mxu0 %v1105
        %v1107 = vand.u32 %v803, 4294901760
        %1108 = vmatpush.msra.mxu0 %v1107
        %v1109 = vand.u32 %v801, 4294901760
        %1110 = vmatpush.msra.mxu0 %v1109
        %v1111 = vand.u32 %v839, 4294901760
        %1112 = vmatmul.f32.gmra.mxu0 %v1111
        %v1113 = vpop.f32.mrf.mxu0
        %v1114 = vadd.f32 %v1077, %v1113
        %v1115 = vand.u32 %v842, 4294901760
        %1116 = vmatmul.f32.gmra.mxu0 %v1115
        %v1117 = vpop.f32.mrf.mxu0
        %v1118 = vadd.f32 %v1081, %v1117
        %v1119 = vand.u32 %v845, 4294901760
        %1120 = vmatmul.f32.gmra.mxu0 %v1119
        %v1121 = vpop.f32.mrf.mxu0
        %v1122 = vadd.f32 %v1085, %v1121
        %v1123 = vand.u32 %v848, 4294901760
        %1124 = vmatmul.f32.gmra.mxu0 %v1123
        %v1125 = vpop.f32.mrf.mxu0
        %v1126 = vadd.f32 %v1089, %v1125
        %1127 = vdwg.mxu0
        %1128 = vmatpush.msra.mxu0 0.0
        %1129 = vmatpush.msra.mxu0 0.0
        %1130 = vmatpush.msra.mxu0 0.0
        %1131 = vmatpush.msra.mxu0 0.0
        %1132 = vmatpush.msra.mxu0 0.0
        %1133 = vmatpush.msra.mxu0 0.0
        %1134 = vmatpush.msra.mxu0 0.0
        %1135 = vmatpush.msra.mxu0 0.0
        %1136 = vmatpush.msra.mxu0 0.0
        %1137 = vmatpush.msra.mxu0 0.0
        %1138 = vmatpush.msra.mxu0 0.0
        %1139 = vmatpush.msra.mxu0 0.0
        %v1140 = vand.u32 %v808, 4294901760
        %1141 = vmatpush.msra.mxu0 %v1140
        %v1142 = vand.u32 %v806, 4294901760
        %1143 = vmatpush.msra.mxu0 %v1142
        %v1144 = vand.u32 %v804, 4294901760
        %1145 = vmatpush.msra.mxu0 %v1144
        %v1146 = vand.u32 %v802, 4294901760
        %1147 = vmatpush.msra.mxu0 %v1146
        %v1148 = vand.u32 %v839, 4294901760
        %v1149 = vsub.f32 %v839, %v1148
        %v1150 = vand.u32 %v1149, 4294901760
        %v1151 = vsub.f32 %v1149, %v1150
        %v1152 = vand.u32 %v1151, 4294901760
        %1153 = vmatmul.f32.gmra.mxu0 %v1152
        %v1154 = vpop.f32.mrf.mxu0
        %v1155 = vadd.f32 %v820, %v1154
        %v1156 = vand.u32 %v842, 4294901760
        %v1157 = vsub.f32 %v842, %v1156
        %v1158 = vand.u32 %v1157, 4294901760
        %v1159 = vsub.f32 %v1157, %v1158
        %v1160 = vand.u32 %v1159, 4294901760
        %1161 = vmatmul.f32.gmra.mxu0 %v1160
        %v1162 = vpop.f32.mrf.mxu0
        %v1163 = vadd.f32 %v825, %v1162
        %v1164 = vand.u32 %v845, 4294901760
        %v1165 = vsub.f32 %v845, %v1164
        %v1166 = vand.u32 %v1165, 4294901760
        %v1167 = vsub.f32 %v1165, %v1166
        %v1168 = vand.u32 %v1167, 4294901760
        %1169 = vmatmul.f32.gmra.mxu0 %v1168
        %v1170 = vpop.f32.mrf.mxu0
        %v1171 = vadd.f32 %v830, %v1170
        %v1172 = vand.u32 %v848, 4294901760
        %v1173 = vsub.f32 %v848, %v1172
        %v1174 = vand.u32 %v1173, 4294901760
        %v1175 = vsub.f32 %v1173, %v1174
        %v1176 = vand.u32 %v1175, 4294901760
        %1177 = vmatmul.f32.gmra.mxu0 %v1176
        %v1178 = vpop.f32.mrf.mxu0
        %v1179 = vadd.f32 %v835, %v1178
        %1180 = vdwg.mxu0
        %1181 = vmatpush.msra.mxu0 0.0
        %1182 = vmatpush.msra.mxu0 0.0
        %1183 = vmatpush.msra.mxu0 0.0
        %1184 = vmatpush.msra.mxu0 0.0
        %1185 = vmatpush.msra.mxu0 0.0
        %1186 = vmatpush.msra.mxu0 0.0
        %1187 = vmatpush.msra.mxu0 0.0
        %1188 = vmatpush.msra.mxu0 0.0
        %1189 = vmatpush.msra.mxu0 0.0
        %1190 = vmatpush.msra.mxu0 0.0
        %1191 = vmatpush.msra.mxu0 0.0
        %1192 = vmatpush.msra.mxu0 0.0
        %v1193 = vand.u32 %v808, 4294901760
        %v1194 = vsub.f32 %v808, %v1193
        %v1195 = vand.u32 %v1194, 4294901760
        %v1196 = vsub.f32 %v1194, %v1195
        %v1197 = vand.u32 %v1196, 4294901760
        %1198 = vmatpush.msra.mxu0 %v1197
        %v1199 = vand.u32 %v806, 4294901760
        %v1200 = vsub.f32 %v806, %v1199
        %v1201 = vand.u32 %v1200, 4294901760
        %v1202 = vsub.f32 %v1200, %v1201
        %v1203 = vand.u32 %v1202, 4294901760
        %1204 = vmatpush.msra.mxu0 %v1203
        %v1205 = vand.u32 %v804, 4294901760
        %v1206 = vsub.f32 %v804, %v1205
        %v1207 = vand.u32 %v1206, 4294901760
        %v1208 = vsub.f32 %v1206, %v1207
        %v1209 = vand.u32 %v1208, 4294901760
        %1210 = vmatpush.msra.mxu0 %v1209
        %v1211 = vand.u32 %v802, 4294901760
        %v1212 = vsub.f32 %v802, %v1211
        %v1213 = vand.u32 %v1212, 4294901760
        %v1214 = vsub.f32 %v1212, %v1213
        %v1215 = vand.u32 %v1214, 4294901760
        %1216 = vmatpush.msra.mxu0 %v1215
        %v1217 = vand.u32 %v839, 4294901760
        %1218 = vmatmul.f32.gmra.mxu0 %v1217
        %v1219 = vpop.f32.mrf.mxu0
        %v1220 = vadd.f32 %v1155, %v1219
        %v1221 = vand.u32 %v842, 4294901760
        %1222 = vmatmul.f32.gmra.mxu0 %v1221
        %v1223 = vpop.f32.mrf.mxu0
        %v1224 = vadd.f32 %v1163, %v1223
        %v1225 = vand.u32 %v845, 4294901760
        %1226 = vmatmul.f32.gmra.mxu0 %v1225
        %v1227 = vpop.f32.mrf.mxu0
        %v1228 = vadd.f32 %v1171, %v1227
        %v1229 = vand.u32 %v848, 4294901760
        %1230 = vmatmul.f32.gmra.mxu0 %v1229
        %v1231 = vpop.f32.mrf.mxu0
        %v1232 = vadd.f32 %v1179, %v1231
        %1233 = vdwg.mxu0
        %1234 = vmatpush.msra.mxu0 0.0
        %1235 = vmatpush.msra.mxu0 0.0
        %1236 = vmatpush.msra.mxu0 0.0
        %1237 = vmatpush.msra.mxu0 0.0
        %1238 = vmatpush.msra.mxu0 0.0
        %1239 = vmatpush.msra.mxu0 0.0
        %1240 = vmatpush.msra.mxu0 0.0
        %1241 = vmatpush.msra.mxu0 0.0
        %1242 = vmatpush.msra.mxu0 0.0
        %1243 = vmatpush.msra.mxu0 0.0
        %1244 = vmatpush.msra.mxu0 0.0
        %1245 = vmatpush.msra.mxu0 0.0
        %v1246 = vand.u32 %v808, 4294901760
        %v1247 = vsub.f32 %v808, %v1246
        %1248 = vmatpush.msra.mxu0 %v1247
        %v1249 = vand.u32 %v806, 4294901760
        %v1250 = vsub.f32 %v806, %v1249
        %1251 = vmatpush.msra.mxu0 %v1250
        %v1252 = vand.u32 %v804, 4294901760
        %v1253 = vsub.f32 %v804, %v1252
        %1254 = vmatpush.msra.mxu0 %v1253
        %v1255 = vand.u32 %v802, 4294901760
        %v1256 = vsub.f32 %v802, %v1255
        %1257 = vmatpush.msra.mxu0 %v1256
        %v1258 = vand.u32 %v839, 4294901760
        %v1259 = vsub.f32 %v839, %v1258
        %1260 = vmatmul.f32.gmra.mxu0 %v1259
        %v1261 = vpop.f32.mrf.mxu0
        %v1262 = vadd.f32 %v1220, %v1261
        %v1263 = vand.u32 %v842, 4294901760
        %v1264 = vsub.f32 %v842, %v1263
        %1265 = vmatmul.f32.gmra.mxu0 %v1264
        %v1266 = vpop.f32.mrf.mxu0
        %v1267 = vadd.f32 %v1224, %v1266
        %v1268 = vand.u32 %v845, 4294901760
        %v1269 = vsub.f32 %v845, %v1268
        %1270 = vmatmul.f32.gmra.mxu0 %v1269
        %v1271 = vpop.f32.mrf.mxu0
        %v1272 = vadd.f32 %v1228, %v1271
        %v1273 = vand.u32 %v848, 4294901760
        %v1274 = vsub.f32 %v848, %v1273
        %1275 = vmatmul.f32.gmra.mxu0 %v1274
        %v1276 = vpop.f32.mrf.mxu0
        %v1277 = vadd.f32 %v1232, %v1276
        %1278 = vdwg.mxu0
        %1279 = vmatpush.msra.mxu0 0.0
        %1280 = vmatpush.msra.mxu0 0.0
        %1281 = vmatpush.msra.mxu0 0.0
        %1282 = vmatpush.msra.mxu0 0.0
        %1283 = vmatpush.msra.mxu0 0.0
        %1284 = vmatpush.msra.mxu0 0.0
        %1285 = vmatpush.msra.mxu0 0.0
        %1286 = vmatpush.msra.mxu0 0.0
        %1287 = vmatpush.msra.mxu0 0.0
        %1288 = vmatpush.msra.mxu0 0.0
        %1289 = vmatpush.msra.mxu0 0.0
        %1290 = vmatpush.msra.mxu0 0.0
        %v1291 = vand.u32 %v808, 4294901760
        %1292 = vmatpush.msra.mxu0 %v1291
        %v1293 = vand.u32 %v806, 4294901760
        %1294 = vmatpush.msra.mxu0 %v1293
        %v1295 = vand.u32 %v804, 4294901760
        %1296 = vmatpush.msra.mxu0 %v1295
        %v1297 = vand.u32 %v802, 4294901760
        %1298 = vmatpush.msra.mxu0 %v1297
        %v1299 = vand.u32 %v839, 4294901760
        %v1300 = vsub.f32 %v839, %v1299
        %v1301 = vand.u32 %v1300, 4294901760
        %1302 = vmatmul.f32.gmra.mxu0 %v1301
        %v1303 = vpop.f32.mrf.mxu0
        %v1304 = vadd.f32 %v1262, %v1303
        %v1305 = vand.u32 %v842, 4294901760
        %v1306 = vsub.f32 %v842, %v1305
        %v1307 = vand.u32 %v1306, 4294901760
        %1308 = vmatmul.f32.gmra.mxu0 %v1307
        %v1309 = vpop.f32.mrf.mxu0
        %v1310 = vadd.f32 %v1267, %v1309
        %v1311 = vand.u32 %v845, 4294901760
        %v1312 = vsub.f32 %v845, %v1311
        %v1313 = vand.u32 %v1312, 4294901760
        %1314 = vmatmul.f32.gmra.mxu0 %v1313
        %v1315 = vpop.f32.mrf.mxu0
        %v1316 = vadd.f32 %v1272, %v1315
        %v1317 = vand.u32 %v848, 4294901760
        %v1318 = vsub.f32 %v848, %v1317
        %v1319 = vand.u32 %v1318, 4294901760
        %1320 = vmatmul.f32.gmra.mxu0 %v1319
        %v1321 = vpop.f32.mrf.mxu0
        %v1322 = vadd.f32 %v1277, %v1321
        %1323 = vdwg.mxu0
        %1324 = vmatpush.msra.mxu0 0.0
        %1325 = vmatpush.msra.mxu0 0.0
        %1326 = vmatpush.msra.mxu0 0.0
        %1327 = vmatpush.msra.mxu0 0.0
        %1328 = vmatpush.msra.mxu0 0.0
        %1329 = vmatpush.msra.mxu0 0.0
        %1330 = vmatpush.msra.mxu0 0.0
        %1331 = vmatpush.msra.mxu0 0.0
        %1332 = vmatpush.msra.mxu0 0.0
        %1333 = vmatpush.msra.mxu0 0.0
        %1334 = vmatpush.msra.mxu0 0.0
        %1335 = vmatpush.msra.mxu0 0.0
        %v1336 = vand.u32 %v808, 4294901760
        %v1337 = vsub.f32 %v808, %v1336
        %v1338 = vand.u32 %v1337, 4294901760
        %1339 = vmatpush.msra.mxu0 %v1338
        %v1340 = vand.u32 %v806, 4294901760
        %v1341 = vsub.f32 %v806, %v1340
        %v1342 = vand.u32 %v1341, 4294901760
        %1343 = vmatpush.msra.mxu0 %v1342
        %v1344 = vand.u32 %v804, 4294901760
        %v1345 = vsub.f32 %v804, %v1344
        %v1346 = vand.u32 %v1345, 4294901760
        %1347 = vmatpush.msra.mxu0 %v1346
        %v1348 = vand.u32 %v802, 4294901760
        %v1349 = vsub.f32 %v802, %v1348
        %v1350 = vand.u32 %v1349, 4294901760
        %1351 = vmatpush.msra.mxu0 %v1350
        %v1352 = vand.u32 %v839, 4294901760
        %1353 = vmatmul.f32.gmra.mxu0 %v1352
        %v1354 = vpop.f32.mrf.mxu0
        %v1355 = vadd.f32 %v1304, %v1354
        %v1356 = vand.u32 %v842, 4294901760
        %1357 = vmatmul.f32.gmra.mxu0 %v1356
        %v1358 = vpop.f32.mrf.mxu0
        %v1359 = vadd.f32 %v1310, %v1358
        %v1360 = vand.u32 %v845, 4294901760
        %1361 = vmatmul.f32.gmra.mxu0 %v1360
        %v1362 = vpop.f32.mrf.mxu0
        %v1363 = vadd.f32 %v1316, %v1362
        %v1364 = vand.u32 %v848, 4294901760
        %1365 = vmatmul.f32.gmra.mxu0 %v1364
        %v1366 = vpop.f32.mrf.mxu0
        %v1367 = vadd.f32 %v1322, %v1366
        %1368 = vdwg.mxu0
        %1369 = vmatpush.msra.mxu0 0.0
        %1370 = vmatpush.msra.mxu0 0.0
        %1371 = vmatpush.msra.mxu0 0.0
        %1372 = vmatpush.msra.mxu0 0.0
        %1373 = vmatpush.msra.mxu0 0.0
        %1374 = vmatpush.msra.mxu0 0.0
        %1375 = vmatpush.msra.mxu0 0.0
        %1376 = vmatpush.msra.mxu0 0.0
        %1377 = vmatpush.msra.mxu0 0.0
        %1378 = vmatpush.msra.mxu0 0.0
        %1379 = vmatpush.msra.mxu0 0.0
        %1380 = vmatpush.msra.mxu0 0.0
        %v1381 = vand.u32 %v808, 4294901760
        %1382 = vmatpush.msra.mxu0 %v1381
        %v1383 = vand.u32 %v806, 4294901760
        %1384 = vmatpush.msra.mxu0 %v1383
        %v1385 = vand.u32 %v804, 4294901760
        %1386 = vmatpush.msra.mxu0 %v1385
        %v1387 = vand.u32 %v802, 4294901760
        %1388 = vmatpush.msra.mxu0 %v1387
        %v1389 = vand.u32 %v839, 4294901760
        %1390 = vmatmul.f32.gmra.mxu0 %v1389
        %v1391 = vpop.f32.mrf.mxu0
        %v1392 = vadd.f32 %v1355, %v1391
        %v1393 = vand.u32 %v842, 4294901760
        %1394 = vmatmul.f32.gmra.mxu0 %v1393
        %v1395 = vpop.f32.mrf.mxu0
        %v1396 = vadd.f32 %v1359, %v1395
        %v1397 = vand.u32 %v845, 4294901760
        %1398 = vmatmul.f32.gmra.mxu0 %v1397
        %v1399 = vpop.f32.mrf.mxu0
        %v1400 = vadd.f32 %v1363, %v1399
        %v1401 = vand.u32 %v848, 4294901760
        %1402 = vmatmul.f32.gmra.mxu0 %v1401
        %v1403 = vpop.f32.mrf.mxu0
        %v1404 = vadd.f32 %v1367, %v1403
        %1405 = vdwg.mxu0
        %v1406 = vmax.f32 %v1114, 0.0
        %v1407 = vmax.f32 %v1392, 0.0
        %v1408 = vmax.f32 %v1118, 0.0
        %v1409 = vmax.f32 %v1396, 0.0
        %v1410 = vmax.f32 %v1122, 0.0
        %v1411 = vmax.f32 %v1400, 0.0
        %v1412 = vmax.f32 %v1126, 0.0
        %v1413 = vmax.f32 %v1404, 0.0
        %v1414 = vld [vmem:[%s5] sm:$0xff]
        %v1415 = vld [vmem:[%s6] sm:$0xff]
        %1417 = vset.pattern.permute.xlu0 0
        %1418 = vperm.xlu0 %1417, %v1415
        %v1419 = vpop.permute.xlu0 %1418
        %v1422 = vsel %vm837, %v1414, 0
        %1424 = vmatpush.msra.mxu0 0.0
        %1425 = vmatpush.msra.mxu0 0.0
        %1426 = vmatpush.msra.mxu0 0.0
        %1427 = vmatpush.msra.mxu0 0.0
        %1428 = vmatpush.msra.mxu0 0.0
        %1429 = vmatpush.msra.mxu0 0.0
        %1430 = vmatpush.msra.mxu0 0.0
        %1431 = vmatpush.msra.mxu0 0.0
        %1432 = vmatpush.msra.mxu0 0.0
        %1433 = vmatpush.msra.mxu0 0.0
        %1434 = vmatpush.msra.mxu0 0.0
        %1435 = vmatpush.msra.mxu0 0.0
        %v1436 = vand.u32 %v1412, 4294901760
        %1437 = vmatpush.msra.mxu0 %v1436
        %v1438 = vand.u32 %v1410, 4294901760
        %1439 = vmatpush.msra.mxu0 %v1438
        %v1440 = vand.u32 %v1408, 4294901760
        %1441 = vmatpush.msra.mxu0 %v1440
        %v1442 = vand.u32 %v1406, 4294901760
        %1443 = vmatpush.msra.mxu0 %v1442
        %v1444 = vand.u32 %v1422, 4294901760
        %v1445 = vsub.f32 %v1422, %v1444
        %v1446 = vand.u32 %v1445, 4294901760
        %v1447 = vsub.f32 %v1445, %v1446
        %v1448 = vand.u32 %v1447, 4294901760
        %1449 = vmatmul.f32.gmra.mxu0 %v1448
        %v1450 = vpop.f32.mrf.mxu0
        %v1451 = vadd.f32 %v1419, %v1450
        %1452 = vdwg.mxu0
        %1453 = vmatpush.msra.mxu0 0.0
        %1454 = vmatpush.msra.mxu0 0.0
        %1455 = vmatpush.msra.mxu0 0.0
        %1456 = vmatpush.msra.mxu0 0.0
        %1457 = vmatpush.msra.mxu0 0.0
        %1458 = vmatpush.msra.mxu0 0.0
        %1459 = vmatpush.msra.mxu0 0.0
        %1460 = vmatpush.msra.mxu0 0.0
        %1461 = vmatpush.msra.mxu0 0.0
        %1462 = vmatpush.msra.mxu0 0.0
        %1463 = vmatpush.msra.mxu0 0.0
        %1464 = vmatpush.msra.mxu0 0.0
        %v1465 = vand.u32 %v1412, 4294901760
        %v1466 = vsub.f32 %v1412, %v1465
        %v1467 = vand.u32 %v1466, 4294901760
        %v1468 = vsub.f32 %v1466, %v1467
        %v1469 = vand.u32 %v1468, 4294901760
        %1470 = vmatpush.msra.mxu0 %v1469
        %v1471 = vand.u32 %v1410, 4294901760
        %v1472 = vsub.f32 %v1410, %v1471
        %v1473 = vand.u32 %v1472, 4294901760
        %v1474 = vsub.f32 %v1472, %v1473
        %v1475 = vand.u32 %v1474, 4294901760
        %1476 = vmatpush.msra.mxu0 %v1475
        %v1477 = vand.u32 %v1408, 4294901760
        %v1478 = vsub.f32 %v1408, %v1477
        %v1479 = vand.u32 %v1478, 4294901760
        %v1480 = vsub.f32 %v1478, %v1479
        %v1481 = vand.u32 %v1480, 4294901760
        %1482 = vmatpush.msra.mxu0 %v1481
        %v1483 = vand.u32 %v1406, 4294901760
        %v1484 = vsub.f32 %v1406, %v1483
        %v1485 = vand.u32 %v1484, 4294901760
        %v1486 = vsub.f32 %v1484, %v1485
        %v1487 = vand.u32 %v1486, 4294901760
        %1488 = vmatpush.msra.mxu0 %v1487
        %v1489 = vand.u32 %v1422, 4294901760
        %1490 = vmatmul.f32.gmra.mxu0 %v1489
        %v1491 = vpop.f32.mrf.mxu0
        %v1492 = vadd.f32 %v1451, %v1491
        %1493 = vdwg.mxu0
        %1494 = vmatpush.msra.mxu0 0.0
        %1495 = vmatpush.msra.mxu0 0.0
        %1496 = vmatpush.msra.mxu0 0.0
        %1497 = vmatpush.msra.mxu0 0.0
        %1498 = vmatpush.msra.mxu0 0.0
        %1499 = vmatpush.msra.mxu0 0.0
        %1500 = vmatpush.msra.mxu0 0.0
        %1501 = vmatpush.msra.mxu0 0.0
        %1502 = vmatpush.msra.mxu0 0.0
        %1503 = vmatpush.msra.mxu0 0.0
        %1504 = vmatpush.msra.mxu0 0.0
        %1505 = vmatpush.msra.mxu0 0.0
        %v1506 = vand.u32 %v1412, 4294901760
        %v1507 = vsub.f32 %v1412, %v1506
        %1508 = vmatpush.msra.mxu0 %v1507
        %v1509 = vand.u32 %v1410, 4294901760
        %v1510 = vsub.f32 %v1410, %v1509
        %1511 = vmatpush.msra.mxu0 %v1510
        %v1512 = vand.u32 %v1408, 4294901760
        %v1513 = vsub.f32 %v1408, %v1512
        %1514 = vmatpush.msra.mxu0 %v1513
        %v1515 = vand.u32 %v1406, 4294901760
        %v1516 = vsub.f32 %v1406, %v1515
        %1517 = vmatpush.msra.mxu0 %v1516
        %v1518 = vand.u32 %v1422, 4294901760
        %v1519 = vsub.f32 %v1422, %v1518
        %1520 = vmatmul.f32.gmra.mxu0 %v1519
        %v1521 = vpop.f32.mrf.mxu0
        %v1522 = vadd.f32 %v1492, %v1521
        %1523 = vdwg.mxu0
        %1524 = vmatpush.msra.mxu0 0.0
        %1525 = vmatpush.msra.mxu0 0.0
        %1526 = vmatpush.msra.mxu0 0.0
        %1527 = vmatpush.msra.mxu0 0.0
        %1528 = vmatpush.msra.mxu0 0.0
        %1529 = vmatpush.msra.mxu0 0.0
        %1530 = vmatpush.msra.mxu0 0.0
        %1531 = vmatpush.msra.mxu0 0.0
        %1532 = vmatpush.msra.mxu0 0.0
        %1533 = vmatpush.msra.mxu0 0.0
        %1534 = vmatpush.msra.mxu0 0.0
        %1535 = vmatpush.msra.mxu0 0.0
        %v1536 = vand.u32 %v1412, 4294901760
        %1537 = vmatpush.msra.mxu0 %v1536
        %v1538 = vand.u32 %v1410, 4294901760
        %1539 = vmatpush.msra.mxu0 %v1538
        %v1540 = vand.u32 %v1408, 4294901760
        %1541 = vmatpush.msra.mxu0 %v1540
        %v1542 = vand.u32 %v1406, 4294901760
        %1543 = vmatpush.msra.mxu0 %v1542
        %v1544 = vand.u32 %v1422, 4294901760
        %v1545 = vsub.f32 %v1422, %v1544
        %v1546 = vand.u32 %v1545, 4294901760
        %1547 = vmatmul.f32.gmra.mxu0 %v1546
        %v1548 = vpop.f32.mrf.mxu0
        %v1549 = vadd.f32 %v1522, %v1548
        %1550 = vdwg.mxu0
        %1551 = vmatpush.msra.mxu0 0.0
        %1552 = vmatpush.msra.mxu0 0.0
        %1553 = vmatpush.msra.mxu0 0.0
        %1554 = vmatpush.msra.mxu0 0.0
        %1555 = vmatpush.msra.mxu0 0.0
        %1556 = vmatpush.msra.mxu0 0.0
        %1557 = vmatpush.msra.mxu0 0.0
        %1558 = vmatpush.msra.mxu0 0.0
        %1559 = vmatpush.msra.mxu0 0.0
        %1560 = vmatpush.msra.mxu0 0.0
        %1561 = vmatpush.msra.mxu0 0.0
        %1562 = vmatpush.msra.mxu0 0.0
        %v1563 = vand.u32 %v1412, 4294901760
        %v1564 = vsub.f32 %v1412, %v1563
        %v1565 = vand.u32 %v1564, 4294901760
        %1566 = vmatpush.msra.mxu0 %v1565
        %v1567 = vand.u32 %v1410, 4294901760
        %v1568 = vsub.f32 %v1410, %v1567
        %v1569 = vand.u32 %v1568, 4294901760
        %1570 = vmatpush.msra.mxu0 %v1569
        %v1571 = vand.u32 %v1408, 4294901760
        %v1572 = vsub.f32 %v1408, %v1571
        %v1573 = vand.u32 %v1572, 4294901760
        %1574 = vmatpush.msra.mxu0 %v1573
        %v1575 = vand.u32 %v1406, 4294901760
        %v1576 = vsub.f32 %v1406, %v1575
        %v1577 = vand.u32 %v1576, 4294901760
        %1578 = vmatpush.msra.mxu0 %v1577
        %v1579 = vand.u32 %v1422, 4294901760
        %1580 = vmatmul.f32.gmra.mxu0 %v1579
        %v1581 = vpop.f32.mrf.mxu0
        %v1582 = vadd.f32 %v1549, %v1581
        %1583 = vdwg.mxu0
        %1584 = vmatpush.msra.mxu0 0.0
        %1585 = vmatpush.msra.mxu0 0.0
        %1586 = vmatpush.msra.mxu0 0.0
        %1587 = vmatpush.msra.mxu0 0.0
        %1588 = vmatpush.msra.mxu0 0.0
        %1589 = vmatpush.msra.mxu0 0.0
        %1590 = vmatpush.msra.mxu0 0.0
        %1591 = vmatpush.msra.mxu0 0.0
        %1592 = vmatpush.msra.mxu0 0.0
        %1593 = vmatpush.msra.mxu0 0.0
        %1594 = vmatpush.msra.mxu0 0.0
        %1595 = vmatpush.msra.mxu0 0.0
        %v1596 = vand.u32 %v1412, 4294901760
        %1597 = vmatpush.msra.mxu0 %v1596
        %v1598 = vand.u32 %v1410, 4294901760
        %1599 = vmatpush.msra.mxu0 %v1598
        %v1600 = vand.u32 %v1408, 4294901760
        %1601 = vmatpush.msra.mxu0 %v1600
        %v1602 = vand.u32 %v1406, 4294901760
        %1603 = vmatpush.msra.mxu0 %v1602
        %v1604 = vand.u32 %v1422, 4294901760
        %1605 = vmatmul.f32.gmra.mxu0 %v1604
        %v1606 = vpop.f32.mrf.mxu0
        %v1607 = vadd.f32 %v1582, %v1606
        %1608 = vdwg.mxu0
        %1609 = vmatpush.msra.mxu0 0.0
        %1610 = vmatpush.msra.mxu0 0.0
        %1611 = vmatpush.msra.mxu0 0.0
        %1612 = vmatpush.msra.mxu0 0.0
        %1613 = vmatpush.msra.mxu0 0.0
        %1614 = vmatpush.msra.mxu0 0.0
        %1615 = vmatpush.msra.mxu0 0.0
        %1616 = vmatpush.msra.mxu0 0.0
        %1617 = vmatpush.msra.mxu0 0.0
        %1618 = vmatpush.msra.mxu0 0.0
        %1619 = vmatpush.msra.mxu0 0.0
        %1620 = vmatpush.msra.mxu0 0.0
        %v1621 = vand.u32 %v1413, 4294901760
        %1622 = vmatpush.msra.mxu0 %v1621
        %v1623 = vand.u32 %v1411, 4294901760
        %1624 = vmatpush.msra.mxu0 %v1623
        %v1625 = vand.u32 %v1409, 4294901760
        %1626 = vmatpush.msra.mxu0 %v1625
        %v1627 = vand.u32 %v1407, 4294901760
        %1628 = vmatpush.msra.mxu0 %v1627
        %v1629 = vand.u32 %v1422, 4294901760
        %v1630 = vsub.f32 %v1422, %v1629
        %v1631 = vand.u32 %v1630, 4294901760
        %v1632 = vsub.f32 %v1630, %v1631
        %v1633 = vand.u32 %v1632, 4294901760
        %1634 = vmatmul.f32.gmra.mxu0 %v1633
        %v1635 = vpop.f32.mrf.mxu0
        %v1636 = vadd.f32 %v1419, %v1635
        %1637 = vdwg.mxu0
        %1638 = vmatpush.msra.mxu0 0.0
        %1639 = vmatpush.msra.mxu0 0.0
        %1640 = vmatpush.msra.mxu0 0.0
        %1641 = vmatpush.msra.mxu0 0.0
        %1642 = vmatpush.msra.mxu0 0.0
        %1643 = vmatpush.msra.mxu0 0.0
        %1644 = vmatpush.msra.mxu0 0.0
        %1645 = vmatpush.msra.mxu0 0.0
        %1646 = vmatpush.msra.mxu0 0.0
        %1647 = vmatpush.msra.mxu0 0.0
        %1648 = vmatpush.msra.mxu0 0.0
        %1649 = vmatpush.msra.mxu0 0.0
        %v1650 = vand.u32 %v1413, 4294901760
        %v1651 = vsub.f32 %v1413, %v1650
        %v1652 = vand.u32 %v1651, 4294901760
        %v1653 = vsub.f32 %v1651, %v1652
        %v1654 = vand.u32 %v1653, 4294901760
        %1655 = vmatpush.msra.mxu0 %v1654
        %v1656 = vand.u32 %v1411, 4294901760
        %v1657 = vsub.f32 %v1411, %v1656
        %v1658 = vand.u32 %v1657, 4294901760
        %v1659 = vsub.f32 %v1657, %v1658
        %v1660 = vand.u32 %v1659, 4294901760
        %1661 = vmatpush.msra.mxu0 %v1660
        %v1662 = vand.u32 %v1409, 4294901760
        %v1663 = vsub.f32 %v1409, %v1662
        %v1664 = vand.u32 %v1663, 4294901760
        %v1665 = vsub.f32 %v1663, %v1664
        %v1666 = vand.u32 %v1665, 4294901760
        %1667 = vmatpush.msra.mxu0 %v1666
        %v1668 = vand.u32 %v1407, 4294901760
        %v1669 = vsub.f32 %v1407, %v1668
        %v1670 = vand.u32 %v1669, 4294901760
        %v1671 = vsub.f32 %v1669, %v1670
        %v1672 = vand.u32 %v1671, 4294901760
        %1673 = vmatpush.msra.mxu0 %v1672
        %v1674 = vand.u32 %v1422, 4294901760
        %1675 = vmatmul.f32.gmra.mxu0 %v1674
        %v1676 = vpop.f32.mrf.mxu0
        %v1677 = vadd.f32 %v1636, %v1676
        %1678 = vdwg.mxu0
        %1679 = vmatpush.msra.mxu0 0.0
        %1680 = vmatpush.msra.mxu0 0.0
        %1681 = vmatpush.msra.mxu0 0.0
        %1682 = vmatpush.msra.mxu0 0.0
        %1683 = vmatpush.msra.mxu0 0.0
        %1684 = vmatpush.msra.mxu0 0.0
        %1685 = vmatpush.msra.mxu0 0.0
        %1686 = vmatpush.msra.mxu0 0.0
        %1687 = vmatpush.msra.mxu0 0.0
        %1688 = vmatpush.msra.mxu0 0.0
        %1689 = vmatpush.msra.mxu0 0.0
        %1690 = vmatpush.msra.mxu0 0.0
        %v1691 = vand.u32 %v1413, 4294901760
        %v1692 = vsub.f32 %v1413, %v1691
        %1693 = vmatpush.msra.mxu0 %v1692
        %v1694 = vand.u32 %v1411, 4294901760
        %v1695 = vsub.f32 %v1411, %v1694
        %1696 = vmatpush.msra.mxu0 %v1695
        %v1697 = vand.u32 %v1409, 4294901760
        %v1698 = vsub.f32 %v1409, %v1697
        %1699 = vmatpush.msra.mxu0 %v1698
        %v1700 = vand.u32 %v1407, 4294901760
        %v1701 = vsub.f32 %v1407, %v1700
        %1702 = vmatpush.msra.mxu0 %v1701
        %v1703 = vand.u32 %v1422, 4294901760
        %v1704 = vsub.f32 %v1422, %v1703
        %1705 = vmatmul.f32.gmra.mxu0 %v1704
        %v1706 = vpop.f32.mrf.mxu0
        %v1707 = vadd.f32 %v1677, %v1706
        %1708 = vdwg.mxu0
        %1709 = vmatpush.msra.mxu0 0.0
        %1710 = vmatpush.msra.mxu0 0.0
        %1711 = vmatpush.msra.mxu0 0.0
        %1712 = vmatpush.msra.mxu0 0.0
        %1713 = vmatpush.msra.mxu0 0.0
        %1714 = vmatpush.msra.mxu0 0.0
        %1715 = vmatpush.msra.mxu0 0.0
        %1716 = vmatpush.msra.mxu0 0.0
        %1717 = vmatpush.msra.mxu0 0.0
        %1718 = vmatpush.msra.mxu0 0.0
        %1719 = vmatpush.msra.mxu0 0.0
        %1720 = vmatpush.msra.mxu0 0.0
        %v1721 = vand.u32 %v1413, 4294901760
        %1722 = vmatpush.msra.mxu0 %v1721
        %v1723 = vand.u32 %v1411, 4294901760
        %1724 = vmatpush.msra.mxu0 %v1723
        %v1725 = vand.u32 %v1409, 4294901760
        %1726 = vmatpush.msra.mxu0 %v1725
        %v1727 = vand.u32 %v1407, 4294901760
        %1728 = vmatpush.msra.mxu0 %v1727
        %v1729 = vand.u32 %v1422, 4294901760
        %v1730 = vsub.f32 %v1422, %v1729
        %v1731 = vand.u32 %v1730, 4294901760
        %1732 = vmatmul.f32.gmra.mxu0 %v1731
        %v1733 = vpop.f32.mrf.mxu0
        %v1734 = vadd.f32 %v1707, %v1733
        %1735 = vdwg.mxu0
        %1736 = vmatpush.msra.mxu0 0.0
        %1737 = vmatpush.msra.mxu0 0.0
        %1738 = vmatpush.msra.mxu0 0.0
        %1739 = vmatpush.msra.mxu0 0.0
        %1740 = vmatpush.msra.mxu0 0.0
        %1741 = vmatpush.msra.mxu0 0.0
        %1742 = vmatpush.msra.mxu0 0.0
        %1743 = vmatpush.msra.mxu0 0.0
        %1744 = vmatpush.msra.mxu0 0.0
        %1745 = vmatpush.msra.mxu0 0.0
        %1746 = vmatpush.msra.mxu0 0.0
        %1747 = vmatpush.msra.mxu0 0.0
        %v1748 = vand.u32 %v1413, 4294901760
        %v1749 = vsub.f32 %v1413, %v1748
        %v1750 = vand.u32 %v1749, 4294901760
        %1751 = vmatpush.msra.mxu0 %v1750
        %v1752 = vand.u32 %v1411, 4294901760
        %v1753 = vsub.f32 %v1411, %v1752
        %v1754 = vand.u32 %v1753, 4294901760
        %1755 = vmatpush.msra.mxu0 %v1754
        %v1756 = vand.u32 %v1409, 4294901760
        %v1757 = vsub.f32 %v1409, %v1756
        %v1758 = vand.u32 %v1757, 4294901760
        %1759 = vmatpush.msra.mxu0 %v1758
        %v1760 = vand.u32 %v1407, 4294901760
        %v1761 = vsub.f32 %v1407, %v1760
        %v1762 = vand.u32 %v1761, 4294901760
        %1763 = vmatpush.msra.mxu0 %v1762
        %v1764 = vand.u32 %v1422, 4294901760
        %1765 = vmatmul.f32.gmra.mxu0 %v1764
        %v1766 = vpop.f32.mrf.mxu0
        %v1767 = vadd.f32 %v1734, %v1766
        %1768 = vdwg.mxu0
        %1769 = vmatpush.msra.mxu0 0.0
        %1770 = vmatpush.msra.mxu0 0.0
        %1771 = vmatpush.msra.mxu0 0.0
        %1772 = vmatpush.msra.mxu0 0.0
        %1773 = vmatpush.msra.mxu0 0.0
        %1774 = vmatpush.msra.mxu0 0.0
        %1775 = vmatpush.msra.mxu0 0.0
        %1776 = vmatpush.msra.mxu0 0.0
        %1777 = vmatpush.msra.mxu0 0.0
        %1778 = vmatpush.msra.mxu0 0.0
        %1779 = vmatpush.msra.mxu0 0.0
        %1780 = vmatpush.msra.mxu0 0.0
        %v1781 = vand.u32 %v1413, 4294901760
        %1782 = vmatpush.msra.mxu0 %v1781
        %v1783 = vand.u32 %v1411, 4294901760
        %1784 = vmatpush.msra.mxu0 %v1783
        %v1785 = vand.u32 %v1409, 4294901760
        %1786 = vmatpush.msra.mxu0 %v1785
        %v1787 = vand.u32 %v1407, 4294901760
        %1788 = vmatpush.msra.mxu0 %v1787
        %v1789 = vand.u32 %v1422, 4294901760
        %1790 = vmatmul.f32.gmra.mxu0 %v1789
        %v1791 = vpop.f32.mrf.mxu0
        %v1792 = vadd.f32 %v1767, %v1791
        %1793 = vdwg.mxu0
        %v1794 = vlaneseq
        %v1795 = vshrl.u32 %v1794, 7
        %v1798 = vrot.slane %v1607, 1
        %v1799 = vrot.slane %v1792, 1
        %v1802 = vsub.f32 %v1607, %v1798
        %v1803 = vsub.f32 %v1792, %v1799
        %v1804 = vsub.f32 0.0, %v1802
        %v1805 = vsub.f32 0.0, %v1803
        %v1806 = vmul.f32 %v1804, 1.442695
        %v1807 = vpow.pop %v1806
        %v1808 = vmul.f32 %v1805, 1.442695
        %v1809 = vpow.pop %v1808
        %v1810 = vadd.f32 %v1807, 1.0
        %v1811 = vadd.f32 %v1809, 1.0
        %v1812 = vrcp.pop %v1810
        %v1813 = vmul.f32 %v1810, %v1812
        %v1814 = vsub.f32 1.0, %v1813
        %v1815 = vmul.f32 %v1812, %v1814
        %v1816 = vadd.f32 %v1812, %v1815
        %vm1817 = vweird.f32 %v1810
        %vm1818 = vweird.f32 %v1812
        %vm1819 = vmor %vm1817, %vm1818
        %v1820 = vsel %vm1819, %v1812, %v1816
        %v1821 = vand.u32 2147483647, %v1810
        %vm1822 = vcmp.eq.f32.partialorder %v1821, 8.507059e+37
        %v1823 = vand.u32 %v1810, 2147483648
        %v1824 = vor.u32 1.1754944e-38, %v1823
        %v1825 = vsel %vm1822, %v1824, %v1820
        %v1826 = vmul.f32 1.0, %v1825
        %v1827 = vrcp.pop %v1811
        %v1828 = vmul.f32 %v1811, %v1827
        %v1829 = vsub.f32 1.0, %v1828
        %v1830 = vmul.f32 %v1827, %v1829
        %v1831 = vadd.f32 %v1827, %v1830
        %vm1832 = vweird.f32 %v1811
        %vm1833 = vweird.f32 %v1827
        %vm1834 = vmor %vm1832, %vm1833
        %v1835 = vsel %vm1834, %v1827, %v1831
        %v1836 = vand.u32 2147483647, %v1811
        %vm1837 = vcmp.eq.f32.partialorder %v1836, 8.507059e+37
        %v1838 = vand.u32 %v1811, 2147483648
        %v1839 = vor.u32 1.1754944e-38, %v1838
        %v1840 = vsel %vm1837, %v1839, %v1835
        %v1841 = vmul.f32 1.0, %v1840
        %v1842 = vperm.slane %v1826, 0
        %v1843 = vperm.slane %v1841, 0
        %vm1844 = vcmp.eq.s32.totalorder %v1795, 0
        %vm1845 = vcmp.eq.s32.totalorder %v1795, 1
        %v1846 = vsub.f32 1.0, %v1842
        %v1847 = vsub.f32 1.0, %v1843
        %v1848 = vsel %vm1845, %v1846, 0.0
        %v1849 = vsel %vm1845, %v1847, 0.0
        %v1850 = vsel %vm1844, %v1842, %v1848
        %v1851 = vsel %vm1844, %v1843, %v1849
        %1852 = vst [vmem:[%s272] sm:$0xff] %v1850
        %1853 = vst [vmem:[%s272 + $0x8] sm:$0xff] %v1851
        %s1854 = sand.u32 %s181, 1
        %s1855 = scalar_lea.sflag [#allocation3], %s1854
        %s1856 = sand.u32 %s181, 1
        %s1857 = smul.addr %s1856, 16
        %s1858 = scalar_lea.vmem [#allocation2], %s1857
        // Predicated region
        $region49: #{tpu_custom_call.1} parent=47 // pred_check
          %p1859 = pneg %p191
        $region50: #{tpu_custom_call.1} parent=47 // pred_check_branch
          %1861 = sbr.rel (%p1859) target = $region52
        $region51: #{tpu_custom_call.1} parent=47 // pred_region
          %s1862 = smul.u32 2, %s21
          %1864 = vsyncadd %s1855, 0
          %s1865 = smul.addr %s1862, 8
          %s1866 = scalar_lea.hbm %s7, %s1865
          %s1868 = sshll.u32 %s1858, 4
          %s1869 = int_to_ptr.vmem [resolvable:$true] %s1868
          %s1870 = sshll.u32 %s1866, 4
          %s1871 = int_to_ptr.hbm [resolvable:$true] %s1870
          %1873 = dma.vmem_to_hbm [thread:$0]  %s1869, 256, %s1871, %s1855
        $region52: #{tpu_custom_call.1} parent=47 // pred_fallthru
          _
      $region48: #{tpu_custom_call.1} parent=5 // pred_fallthru
        _
      %p1874 = scmp.le.s32.totalorder 2, %s16
      // Predicated region
      $region53: #{tpu_custom_call.1} parent=5 // pred_check
        %p1875 = pneg %p1874
      $region54: #{tpu_custom_call.1} parent=5 // pred_check_branch
        %1877 = sbr.rel (%p1875) target = $region56
      $region55: #{tpu_custom_call.1} parent=5 // pred_region
        %s1878 = ssub.s32 %s16, 2
        // Predicated region
        $region57: #{tpu_custom_call.1} parent=55 // pred_check
          %p1879 = pneg %p197
        $region58: #{tpu_custom_call.1} parent=55 // pred_check_branch
          %1881 = sbr.rel (%p1879) target = $region60
        $region59: #{tpu_custom_call.1} parent=55 // pred_region
          %s1882 = sand.u32 %s182, 1
          %s1883 = scalar_lea.sflag [#allocation3], %s1882
          %s1884 = sand.u32 %s182, 1
          %s1885 = smul.addr %s1884, 16
          %s1886 = scalar_lea.vmem [#allocation2], %s1885
          %1888 = dma.done %s1883, 256
        $region60: #{tpu_custom_call.1} parent=55 // pred_fallthru
          _
      $region56: #{tpu_custom_call.1} parent=5 // pred_fallthru
        _
    $region6: #{tpu_custom_call.1} parent=1 // loop_footer
      %s20 = sadd.s32 1, %s16
    $region7: #{tpu_custom_call.1} parent=1 // loop_footer_branch
      %15 = sbr.rel target = $region3
    $region8: #{tpu_custom_call.1} parent=1 // loop_exit
      _
    %1889 = vsyncpa [#allocation3], 1
    %s1890 = scalar_lea.sflag [#allocation3], 1
    %1891 = vsyncpa %s1890, 1

</llo_original>
